<compile_context>
chip_gen: v6e
topology: v6e:2x2x1
jax: 0.10.0
libtpu: 0.0.40
codegen_flags: <defaults>
</compile_context>

<pallas_src>
import math
import functools

import jax
import jax.numpy as jnp
import numpy as np
from jax.experimental import pallas as pl
from jax.experimental.pallas import tpu as pltpu

LN_EPS = 1e-5


def _layer_norm(z, gamma, beta):
    mu = jnp.mean(z, axis=-1, keepdims=True)
    var = jnp.mean((z - mu) ** 2, axis=-1, keepdims=True)
    return (z - mu) * jax.lax.rsqrt(var + LN_EPS) * gamma + beta


def performer_self_layer_kernel(
    xq_ref,                                  # (1, tq, D) f32   query rows (residual path)
    xkv_ref,                                 # (1, L,  D) bf16  full sequence (proj only)
    wq_ref, bq_ref,                          # (D, D) bf16, (1, D) f32
    wkv_ref, bkv_ref,                        # (D, 2D) bf16, (1, 2D) f32
    wo_ref, bo_ref,                          # (D, D) bf16, (1, D) f32
    g2_ref, be2_ref,                         # (1, D), (1, D)   LayerNorm norm2
    w1_ref, b1_ref,                          # (D, F) bf16, (1, F)   fc1
    w2_ref, b2_ref,                          # (F, D) bf16, (1, D)   fc2
    g3_ref, be3_ref,                         # (1, D), (1, D)   LayerNorm norm3
    o_ref,                                   # (1, tq, D) f32
    kbt_sc,                                  # (D, L) bf16 scratch: K^T, persisted per batch
    vb_sc,                                   # (L, D) bf16 scratch: V,   persisted per batch
    ctx_sc,                                  # (tq, D) bf16 scratch: per-tile head outputs
    *, num_heads, dim_head,
):
    D = num_heads * dim_head
    scale = 1.0 / math.sqrt(dim_head)

    # ---- K/V projection: once per batch (qi == 0 is the first step of the
    # innermost "arbitrary" axis), persisted in bf16 scratch for all query
    # tiles of this batch.  One shared K transpose instead of H per-step
    # transposed-RHS relayouts.
    @pl.when(pl.program_id(1) == 0)
    def _():
        kv = jnp.dot(xkv_ref[0], wkv_ref[...],
                     preferred_element_type=jnp.float32) + bkv_ref[...]   # (L, 2D) f32
        kbt_sc[...] = kv[:, :D].T.astype(jnp.bfloat16)                    # (D, L)
        vb_sc[...] = kv[:, D:].astype(jnp.bfloat16)                       # (L, D)

    xq = xq_ref[0]                                                        # (tq, D) f32

    # ---- query projection (bf16 MXU, f32 accumulation); fold 1/sqrt(Dh)
    # into q once instead of scaling each (tq, L) score block per head.
    q = jnp.dot(xq.astype(jnp.bfloat16), wq_ref[...],
                preferred_element_type=jnp.float32) + bq_ref[...]         # (tq, D)
    qb = (q * scale).astype(jnp.bfloat16)

    # ---- per-head exact softmax attention (softmax math in f32).
    # Each head writes its (tq, Dh) output directly into a lane slice of the
    # (tq, D) bf16 scratch (no jnp.concatenate re-pack); K is read via cheap
    # sublane slices of the pre-transposed kbt scratch.
    # Static unrolled loop is appropriate for small num_heads.
    # TODO(synk): for num_heads > ~8 or Dh < 128 on v6e/v7x, switch to a
    #   head-batched dot_general / lax.fori_loop to bound live ranges and
    #   fill the 256-wide MXU.
    for h in range(num_heads):
        sl = slice(h * dim_head, (h + 1) * dim_head)
        s = jnp.dot(qb[:, sl], kbt_sc[sl, :],
                    preferred_element_type=jnp.float32)                   # (tq, L)
        s = s - jnp.max(s, axis=-1, keepdims=True)
        p = jnp.exp(s)
        p = p * pl.reciprocal(jnp.sum(p, axis=-1, keepdims=True), approx=True)
        ctx_sc[:, sl] = jnp.dot(p.astype(jnp.bfloat16), vb_sc[:, sl],
                                preferred_element_type=jnp.float32
                                ).astype(jnp.bfloat16)                     # (tq, Dh)

    # ---- single full-width output projection ----
    attn = jnp.dot(ctx_sc[...], wo_ref[...],
                   preferred_element_type=jnp.float32) + bo_ref[...]      # (tq, D)

    # ---- residual + LayerNorm (norm2); residual uses the f32 query rows ----
    y = _layer_norm(xq + attn, g2_ref[...], be2_ref[...])

    # ---- position-wise feed-forward ----
    h1 = jnp.maximum(
        jnp.dot(y.astype(jnp.bfloat16), w1_ref[...],
                preferred_element_type=jnp.float32) + b1_ref[...], 0.0)
    ff = jnp.dot(h1.astype(jnp.bfloat16), w2_ref[...],
                 preferred_element_type=jnp.float32) + b2_ref[...]

    # ---- residual + LayerNorm (norm3) ----
    o_ref[0] = _layer_norm(y + ff, g3_ref[...], be3_ref[...])


def _pick_q_tile(L):
    for t in (256, 128, 64, 32, 16, 8):
        if t <= L and L % t == 0:
            return t
    return L                     # L not a multiple of 8: single full tile


def _estimate_vmem_bytes(L, D, F, tq):
    """Rough in-kernel footprint: pipelined blocks + scratch + live temporaries."""
    bf, f32 = 2, 4
    blocks = (
        2 * tq * D * f32                          # xq (double-buffered)
        + 2 * L * D * bf                          # xkv bf16 (double-buffered)
        + 2 * tq * D * f32                        # output (double-buffered)
        + (D * D + D * 2 * D + D * D + D * F + F * D) * bf   # weights, Buffered(1)
        + (8 * D + F) * f32                       # biases / LN params
    )
    scratch = (D * L + L * D + tq * D) * bf       # kbT, V, ctx
    live = (
        L * 2 * D * f32                           # (L, 2D) kv projection at qi == 0
        + 2 * tq * L * f32                        # per-head scores + exp
        + tq * F * f32                            # ffn hidden
        + 6 * tq * D * f32                        # q / attn / y / ff working set
    )
    return blocks + scratch + live


def _vmem_limit_bytes(L, D, F, tq):
    # Footprint + margin, floored at the 32 MiB scoped default and capped at
    # 3/4 of physical VMEM (the old 7/8 heuristic left no headroom on v7x's
    # 64 MiB parts once intermediates were accounted for).
    try:
        cap = int(pltpu.get_tpu_info().vmem_capacity_bytes)
    except Exception:
        return None
    if cap <= 0:
        return None
    want = max(32 * 1024 * 1024, _estimate_vmem_bytes(L, D, F, tq) + 8 * 1024 * 1024)
    return min((cap * 3) // 4, want)


def _cost_estimate(B, L, D, F, H):
    flops = (
        2 * B * L * D * D              # q projection
        + 2 * B * L * D * (2 * D)      # packed k/v projection (once per batch)
        + 4 * B * L * L * D            # QK^T + PV
        + 2 * B * L * D * D            # output projection
        + 4 * B * L * D * F            # fc1 + fc2
    )
    transcendentals = B * H * L * L + 2 * B * L        # exp(scores) + LN rsqrt
    bytes_accessed = (
        B * L * D * (4 + 2 + 4)                                         # x f32 + x bf16 + out f32
        + (D * D + 2 * D * D + D * D + D * F + F * D) * 2               # bf16 weights
        + (8 * D + F) * 4                                               # f32 biases / LN params
    )
    return pl.CostEstimate(flops=flops, transcendentals=transcendentals,
                           bytes_accessed=bytes_accessed)


def performer_self_layer(x, params, *, num_heads):
    """x: (B, L, D) float32. params: dict of kernel-layout weights."""
    B, L, D = x.shape
    Dh = D // num_heads
    F = params["w1"].shape[1]
    tq = _pick_q_tile(L)
    n_qt = L // tq

    # Full-sequence operand only feeds bf16 matmuls -> ship it as bf16.
    x_bf = x.astype(jnp.bfloat16)

    def const(shape):
        # Constant-index weight/bias blocks: single-buffered (never re-DMA'd,
        # so a second buffer is pure dead VMEM, esp. on v7x).
        nd = len(shape)
        return pl.BlockSpec(shape, lambda b, qi: (0,) * nd,
                            pipeline_mode=pl.Buffered(1))

    xq_spec = pl.BlockSpec((1, tq, D), lambda b, qi: (b, qi, 0))
    xkv_spec = pl.BlockSpec((1, L, D), lambda b, qi: (b, 0, 0))   # resident across qi
    out_spec = pl.BlockSpec((1, tq, D), lambda b, qi: (b, qi, 0))

    kern = functools.partial(
        performer_self_layer_kernel, num_heads=num_heads, dim_head=Dh)

    # qi must be "arbitrary": the persistent KV scratch is filled at qi == 0.
    # NOTE(v7x): at B == 1 this parks one TensorCore; an explicit core_map
    # split of the query tiles with per-core KV scratch would recover it.
    cp_kwargs = dict(dimension_semantics=("parallel", "arbitrary"))
    vl = _vmem_limit_bytes(L, D, F, tq)
    if vl is not None:
        cp_kwargs["vmem_limit_bytes"] = vl

    return pl.pallas_call(
        kern,
        out_shape=jax.ShapeDtypeStruct((B, L, D), jnp.float32),
        grid_spec=pltpu.PrefetchScalarGridSpec(
            num_scalar_prefetch=0,
            grid=(B, n_qt),
            in_specs=[
                xq_spec, xkv_spec,
                const((D, D)), const((1, D)),            # q projection
                const((D, 2 * D)), const((1, 2 * D)),    # packed k/v projection
                const((D, D)), const((1, D)),            # output projection
                const((1, D)), const((1, D)),            # norm2
                const((D, F)), const((1, F)),            # fc1
                const((F, D)), const((1, D)),            # fc2
                const((1, D)), const((1, D)),            # norm3
            ],
            out_specs=out_spec,
            scratch_shapes=[
                pltpu.VMEM((D, L), jnp.bfloat16),        # K^T, persisted per batch
                pltpu.VMEM((L, D), jnp.bfloat16),        # V,   persisted per batch
                pltpu.VMEM((tq, D), jnp.bfloat16),       # per-tile head outputs
            ],
        ),
        compiler_params=pltpu.CompilerParams(**cp_kwargs),
        cost_estimate=_cost_estimate(B, L, D, F, num_heads),
    )(
        x, x_bf,
        params["wq"], params["bq"],
        params["wkv"], params["bkv"],
        params["wo"], params["bo"],
        params["g2"], params["be2"],
        params["w1"], params["b1"], params["w2"], params["b2"],
        params["g3"], params["be3"],
    )


def make_params(key, d_model, num_heads, d_ff):
    """Deterministic synthetic weights, already in kernel layout."""
    ks = jax.random.split(key, 12)
    n = lambda k, shape: (0.05 * jax.random.normal(k, shape)).astype(jnp.float32)

    # torch Linear weight is (out, in); we store the transposed (in, out) form.
    wq_t = n(ks[0], (d_model, d_model))
    wk_t = n(ks[1], (d_model, d_model))
    wv_t = n(ks[2], (d_model, d_model))
    wo_t = n(ks[3], (d_model, d_model))
    bq = n(ks[4], (d_model,))
    bk = n(ks[5], (d_model,))
    bv = n(ks[6], (d_model,))
    bo = n(ks[7], (d_model,))
    w1_t = n(ks[8], (d_model, d_ff))
    b1 = n(ks[9], (d_ff,))
    w2_t = n(ks[10], (d_ff, d_model))
    b2 = n(ks[11], (d_model,))

    bf = lambda w: w.astype(jnp.bfloat16)

    return {
        # kernel layout: bf16 matmul weights, f32 biases / LN params
        "wq": bf(wq_t), "bq": bq.reshape(1, d_model),
        "wkv": bf(jnp.concatenate([wk_t, wv_t], axis=1)),
        "bkv": jnp.concatenate([bk, bv]).reshape(1, 2 * d_model),
        "wo": bf(wo_t), "bo": bo.reshape(1, d_model),
        "g2": jnp.ones((1, d_model), jnp.float32),
        "be2": jnp.zeros((1, d_model), jnp.float32),
        "w1": bf(w1_t), "b1": b1.reshape(1, d_ff),
        "w2": bf(w2_t), "b2": b2.reshape(1, d_model),
        "g3": jnp.ones((1, d_model), jnp.float32),
        "be3": jnp.zeros((1, d_model), jnp.float32),
        # float32 originals for the pure-JAX reference
        "_wq_t": wq_t, "_wk_t": wk_t, "_wv_t": wv_t, "_wo_t": wo_t,
        "_bq": bq, "_bk": bk, "_bv": bv, "_bo": bo,
        "_w1_t": w1_t, "_b1": b1, "_w2_t": w2_t, "_b2": b2,
    }


def reference(x, p, num_heads):
    B, L, D = x.shape
    Dh = D // num_heads

    def ln(z, g, b):
        mu = jnp.mean(z, -1, keepdims=True)
        var = jnp.mean((z - mu) ** 2, -1, keepdims=True)
        return (z - mu) / jnp.sqrt(var + LN_EPS) * g + b

    q = x @ p["_wq_t"] + p["_bq"]
    k = x @ p["_wk_t"] + p["_bk"]
    v = x @ p["_wv_t"] + p["_bv"]
    q = q.reshape(B, L, num_heads, Dh).transpose(0, 2, 1, 3)
    k = k.reshape(B, L, num_heads, Dh).transpose(0, 2, 1, 3)
    v = v.reshape(B, L, num_heads, Dh).transpose(0, 2, 1, 3)
    s = jnp.einsum("bhqd,bhkd->bhqk", q, k) / math.sqrt(Dh)
    a = jax.nn.softmax(s, axis=-1)
    o = jnp.einsum("bhqk,bhkd->bhqd", a, v).transpose(0, 2, 1, 3).reshape(B, L, D)
    attn = o @ p["_wo_t"] + p["_bo"]
    y = ln(x + attn, p["g2"][0], p["be2"][0])
    ff = jnp.maximum(y @ p["_w1_t"] + p["_b1"], 0.0) @ p["_w2_t"] + p["_b2"]
    return ln(y + ff, p["g3"][0], p["be3"][0])


if __name__ == "__main__":
    B, L, D, H, F = 2, 8, 32, 4, 64
    key = jax.random.PRNGKey(0)
    kx, kp = jax.random.split(key)
    x = jax.random.normal(kx, (B, L, D), dtype=jnp.float32)
    params = make_params(kp, D, H, F)

    out = performer_self_layer(x, params, num_heads=H)
    out = jax.block_until_ready(out)

    ref = reference(x, params, H)
    # tolerance loosened vs f32 reference because matmul operands are bf16
    np.testing.assert_allclose(np.asarray(out), np.asarray(ref),
                               rtol=2e-2, atol=2e-2)
    print("KERNEL_OK")
</pallas_src>

<mosaic_0001>
module attributes {stable_mosaic.version = 11 : i64} {
  func.func @performer_self_layer_kernel(%arg0: i32, %arg1: i32, %arg2: memref<1x8x32xf32, #tpu.memory_space<vmem>>, %arg3: memref<1x8x32xbf16, #tpu.memory_space<vmem>>, %arg4: memref<32x32xbf16, #tpu.memory_space<vmem>>, %arg5: memref<1x32xf32, #tpu.memory_space<vmem>>, %arg6: memref<32x64xbf16, #tpu.memory_space<vmem>>, %arg7: memref<1x64xf32, #tpu.memory_space<vmem>>, %arg8: memref<32x32xbf16, #tpu.memory_space<vmem>>, %arg9: memref<1x32xf32, #tpu.memory_space<vmem>>, %arg10: memref<1x32xf32, #tpu.memory_space<vmem>>, %arg11: memref<1x32xf32, #tpu.memory_space<vmem>>, %arg12: memref<32x64xbf16, #tpu.memory_space<vmem>>, %arg13: memref<1x64xf32, #tpu.memory_space<vmem>>, %arg14: memref<64x32xbf16, #tpu.memory_space<vmem>>, %arg15: memref<1x32xf32, #tpu.memory_space<vmem>>, %arg16: memref<1x32xf32, #tpu.memory_space<vmem>>, %arg17: memref<1x32xf32, #tpu.memory_space<vmem>>, %arg18: memref<1x8x32xf32, #tpu.memory_space<vmem>>, %arg19: memref<32x8xbf16, #tpu.memory_space<vmem>>, %arg20: memref<8x32xbf16, #tpu.memory_space<vmem>>, %arg21: memref<8x32xbf16, #tpu.memory_space<vmem>>) attributes {dimension_semantics = [#tpu.dimension_semantics<parallel>, #tpu.dimension_semantics<arbitrary>], iteration_bounds = array<i64: 2, 1>, scalar_prefetch = 0 : i64, scratch_operands = 3 : i64, tpu.core_type = #tpu.core_type<tc>, window_params = [{transform_indices = @transform_0, window_bounds = array<i64: 1, 8, 32>}, {transform_indices = @transform_1, window_bounds = array<i64: 1, 8, 32>}, {pipeline_mode = #tpu.pipeline_mode<synchronous>, transform_indices = @transform_2, window_bounds = array<i64: 32, 32>}, {pipeline_mode = #tpu.pipeline_mode<synchronous>, transform_indices = @transform_3, window_bounds = array<i64: 1, 32>}, {pipeline_mode = #tpu.pipeline_mode<synchronous>, transform_indices = @transform_4, window_bounds = array<i64: 32, 64>}, {pipeline_mode = #tpu.pipeline_mode<synchronous>, transform_indices = @transform_5, window_bounds = array<i64: 1, 64>}, {pipeline_mode = #tpu.pipeline_mode<synchronous>, transform_indices = @transform_6, window_bounds = array<i64: 32, 32>}, {pipeline_mode = #tpu.pipeline_mode<synchronous>, transform_indices = @transform_7, window_bounds = array<i64: 1, 32>}, {pipeline_mode = #tpu.pipeline_mode<synchronous>, transform_indices = @transform_8, window_bounds = array<i64: 1, 32>}, {pipeline_mode = #tpu.pipeline_mode<synchronous>, transform_indices = @transform_9, window_bounds = array<i64: 1, 32>}, {pipeline_mode = #tpu.pipeline_mode<synchronous>, transform_indices = @transform_10, window_bounds = array<i64: 32, 64>}, {pipeline_mode = #tpu.pipeline_mode<synchronous>, transform_indices = @transform_11, window_bounds = array<i64: 1, 64>}, {pipeline_mode = #tpu.pipeline_mode<synchronous>, transform_indices = @transform_12, window_bounds = array<i64: 64, 32>}, {pipeline_mode = #tpu.pipeline_mode<synchronous>, transform_indices = @transform_13, window_bounds = array<i64: 1, 32>}, {pipeline_mode = #tpu.pipeline_mode<synchronous>, transform_indices = @transform_14, window_bounds = array<i64: 1, 32>}, {pipeline_mode = #tpu.pipeline_mode<synchronous>, transform_indices = @transform_15, window_bounds = array<i64: 1, 32>}, {transform_indices = @transform_16, window_bounds = array<i64: 1, 8, 32>}]} {
    %c0_i32 = arith.constant 0 : i32
    %0 = arith.cmpi eq, %arg1, %c0_i32 : i32
    %1 = arith.extui %0 : i1 to i32
    %c0_i32_0 = arith.constant 0 : i32
    %2 = arith.cmpi ne, %1, %c0_i32_0 : i32
    scf.if %2 {
      %c0_84 = arith.constant 0 : index
      %c0_85 = arith.constant 0 : index
      %c0_86 = arith.constant 0 : index
      %159 = vector.load %arg3[%c0_84, %c0_85, %c0_86] : memref<1x8x32xbf16, #tpu.memory_space<vmem>>, vector<1x8x32xbf16>
      %160 = vector.shape_cast %159 : vector<1x8x32xbf16> to vector<8x32xbf16>
      %c0_87 = arith.constant 0 : index
      %c0_88 = arith.constant 0 : index
      %161 = vector.load %arg6[%c0_87, %c0_88] : memref<32x64xbf16, #tpu.memory_space<vmem>>, vector<32x64xbf16>
      %cst_89 = arith.constant dense<0.000000e+00> : vector<8x64xf32>
      %162 = tpu.matmul %160, %161, %cst_89 {dimension_numbers = #tpu.dot_dimension_numbers<[1], [0], [0], [1], [0, 0, 1, 1], [], []>} : vector<8x32xbf16>, vector<32x64xbf16>, vector<8x64xf32> -> vector<8x64xf32>
      %c0_90 = arith.constant 0 : index
      %c0_91 = arith.constant 0 : index
      %163 = vector.load %arg7[%c0_90, %c0_91] : memref<1x64xf32, #tpu.memory_space<vmem>>, vector<1x64xf32>
      %164 = vector.broadcast %163 : vector<1x64xf32> to vector<8x64xf32>
      %165 = arith.addf %162, %164 : vector<8x64xf32>
      %166 = vector.extract_strided_slice %165 {offsets = [0, 0], sizes = [8, 32], strides = [1, 1]} : vector<8x64xf32> to vector<8x32xf32>
      %167 = tpu.transpose %166, [1, 0] : vector<8x32xf32> -> vector<32x8xf32>
      %168 = arith.truncf %167 : vector<32x8xf32> to vector<32x8xbf16>
      %c0_92 = arith.constant 0 : index
      %c0_93 = arith.constant 0 : index
      %169 = vector.load %arg19[%c0_92, %c0_93] : memref<32x8xbf16, #tpu.memory_space<vmem>>, vector<32x8xbf16>
      tpu.vector_store %arg19[%c0_92, %c0_93], %168 {strides = array<i32>} : memref<32x8xbf16, #tpu.memory_space<vmem>>, vector<32x8xbf16>,
      %170 = vector.extract_strided_slice %165 {offsets = [0, 32], sizes = [8, 32], strides = [1, 1]} : vector<8x64xf32> to vector<8x32xf32>
      %171 = arith.truncf %170 : vector<8x32xf32> to vector<8x32xbf16>
      %c0_94 = arith.constant 0 : index
      %c0_95 = arith.constant 0 : index
      %172 = vector.load %arg20[%c0_94, %c0_95] : memref<8x32xbf16, #tpu.memory_space<vmem>>, vector<8x32xbf16>
      tpu.vector_store %arg20[%c0_94, %c0_95], %171 {strides = array<i32>} : memref<8x32xbf16, #tpu.memory_space<vmem>>, vector<8x32xbf16>,
    } else {
    }
    %c0 = arith.constant 0 : index
    %c0_1 = arith.constant 0 : index
    %c0_2 = arith.constant 0 : index
    %3 = vector.load %arg2[%c0, %c0_1, %c0_2] : memref<1x8x32xf32, #tpu.memory_space<vmem>>, vector<1x8x32xf32>
    %4 = vector.shape_cast %3 : vector<1x8x32xf32> to vector<8x32xf32>
    %5 = arith.truncf %4 : vector<8x32xf32> to vector<8x32xbf16>
    %c0_3 = arith.constant 0 : index
    %c0_4 = arith.constant 0 : index
    %6 = vector.load %arg4[%c0_3, %c0_4] : memref<32x32xbf16, #tpu.memory_space<vmem>>, vector<32x32xbf16>
    %cst = arith.constant dense<0.000000e+00> : vector<8x32xf32>
    %7 = tpu.matmul %5, %6, %cst {dimension_numbers = #tpu.dot_dimension_numbers<[1], [0], [0], [1], [0, 0, 1, 1], [], []>} : vector<8x32xbf16>, vector<32x32xbf16>, vector<8x32xf32> -> vector<8x32xf32>
    %c0_5 = arith.constant 0 : index
    %c0_6 = arith.constant 0 : index
    %8 = vector.load %arg5[%c0_5, %c0_6] : memref<1x32xf32, #tpu.memory_space<vmem>>, vector<1x32xf32>
    %9 = vector.broadcast %8 : vector<1x32xf32> to vector<8x32xf32>
    %10 = arith.addf %7, %9 : vector<8x32xf32>
    %cst_7 = arith.constant 0.353553385 : f32
    %11 = vector.broadcast %cst_7 : f32 to vector<8x32xf32>
    %12 = arith.mulf %10, %11 : vector<8x32xf32>
    %13 = arith.truncf %12 : vector<8x32xf32> to vector<8x32xbf16>
    %14 = vector.extract_strided_slice %13 {offsets = [0, 0], sizes = [8, 8], strides = [1, 1]} : vector<8x32xbf16> to vector<8x8xbf16>
    %c0_8 = arith.constant 0 : index
    %c0_9 = arith.constant 0 : index
    %15 = vector.load %arg19[%c0_8, %c0_9] : memref<32x8xbf16, #tpu.memory_space<vmem>>, vector<8x8xbf16>
    %cst_10 = arith.constant dense<0.000000e+00> : vector<8x8xf32>
    %16 = tpu.matmul %14, %15, %cst_10 {dimension_numbers = #tpu.dot_dimension_numbers<[1], [0], [0], [1], [0, 0, 1, 1], [], []>} : vector<8x8xbf16>, vector<8x8xbf16>, vector<8x8xf32> -> vector<8x8xf32>
    %cst_11 = arith.constant dense<0xFF800000> : vector<8xf32>
    %17 = vector.multi_reduction <maximumf>, %16, %cst_11 [1] : vector<8x8xf32> to vector<8xf32>
    %18 = vector.shape_cast %17 : vector<8xf32> to vector<8x1xf32>
    %19 = vector.broadcast %18 : vector<8x1xf32> to vector<8x8xf32>
    %20 = arith.subf %16, %19 : vector<8x8xf32>
    %21 = math.exp %20 : vector<8x8xf32>
    %cst_12 = arith.constant dense<0.000000e+00> : vector<8xf32>
    %22 = vector.multi_reduction <add>, %21, %cst_12 [1] : vector<8x8xf32> to vector<8xf32>
    %23 = vector.shape_cast %22 : vector<8xf32> to vector<8x1xf32>
    %24 = tpu.reciprocal %23 {approx = true} : vector<8x1xf32> -> vector<8x1xf32>
    %25 = vector.broadcast %24 : vector<8x1xf32> to vector<8x8xf32>
    %26 = arith.mulf %21, %25 : vector<8x8xf32>
    %27 = arith.truncf %26 : vector<8x8xf32> to vector<8x8xbf16>
    %c0_13 = arith.constant 0 : index
    %c0_14 = arith.constant 0 : index
    %28 = vector.load %arg20[%c0_13, %c0_14] : memref<8x32xbf16, #tpu.memory_space<vmem>>, vector<8x8xbf16>
    %cst_15 = arith.constant dense<0.000000e+00> : vector<8x8xf32>
    %29 = tpu.matmul %27, %28, %cst_15 {dimension_numbers = #tpu.dot_dimension_numbers<[1], [0], [0], [1], [0, 0, 1, 1], [], []>} : vector<8x8xbf16>, vector<8x8xbf16>, vector<8x8xf32> -> vector<8x8xf32>
    %30 = arith.truncf %29 : vector<8x8xf32> to vector<8x8xbf16>
    %c0_16 = arith.constant 0 : index
    %c0_17 = arith.constant 0 : index
    %31 = vector.load %arg21[%c0_16, %c0_17] : memref<8x32xbf16, #tpu.memory_space<vmem>>, vector<8x8xbf16>
    tpu.vector_store %arg21[%c0_16, %c0_17], %30 {strides = array<i32>} : memref<8x32xbf16, #tpu.memory_space<vmem>>, vector<8x8xbf16>,
    %32 = vector.extract_strided_slice %13 {offsets = [0, 8], sizes = [8, 8], strides = [1, 1]} : vector<8x32xbf16> to vector<8x8xbf16>
    %c8 = arith.constant 8 : index
    %c0_18 = arith.constant 0 : index
    %33 = vector.load %arg19[%c8, %c0_18] : memref<32x8xbf16, #tpu.memory_space<vmem>>, vector<8x8xbf16>
    %cst_19 = arith.constant dense<0.000000e+00> : vector<8x8xf32>
    %34 = tpu.matmul %32, %33, %cst_19 {dimension_numbers = #tpu.dot_dimension_numbers<[1], [0], [0], [1], [0, 0, 1, 1], [], []>} : vector<8x8xbf16>, vector<8x8xbf16>, vector<8x8xf32> -> vector<8x8xf32>
    %cst_20 = arith.constant dense<0xFF800000> : vector<8xf32>
    %35 = vector.multi_reduction <maximumf>, %34, %cst_20 [1] : vector<8x8xf32> to vector<8xf32>
    %36 = vector.shape_cast %35 : vector<8xf32> to vector<8x1xf32>
    %37 = vector.broadcast %36 : vector<8x1xf32> to vector<8x8xf32>
    %38 = arith.subf %34, %37 : vector<8x8xf32>
    %39 = math.exp %38 : vector<8x8xf32>
    %cst_21 = arith.constant dense<0.000000e+00> : vector<8xf32>
    %40 = vector.multi_reduction <add>, %39, %cst_21 [1] : vector<8x8xf32> to vector<8xf32>
    %41 = vector.shape_cast %40 : vector<8xf32> to vector<8x1xf32>
    %42 = tpu.reciprocal %41 {approx = true} : vector<8x1xf32> -> vector<8x1xf32>
    %43 = vector.broadcast %42 : vector<8x1xf32> to vector<8x8xf32>
    %44 = arith.mulf %39, %43 : vector<8x8xf32>
    %45 = arith.truncf %44 : vector<8x8xf32> to vector<8x8xbf16>
    %c0_22 = arith.constant 0 : index
    %c8_23 = arith.constant 8 : index
    %46 = vector.load %arg20[%c0_22, %c8_23] : memref<8x32xbf16, #tpu.memory_space<vmem>>, vector<8x8xbf16>
    %cst_24 = arith.constant dense<0.000000e+00> : vector<8x8xf32>
    %47 = tpu.matmul %45, %46, %cst_24 {dimension_numbers = #tpu.dot_dimension_numbers<[1], [0], [0], [1], [0, 0, 1, 1], [], []>} : vector<8x8xbf16>, vector<8x8xbf16>, vector<8x8xf32> -> vector<8x8xf32>
    %48 = arith.truncf %47 : vector<8x8xf32> to vector<8x8xbf16>
    %c0_25 = arith.constant 0 : index
    %c8_26 = arith.constant 8 : index
    %49 = vector.load %arg21[%c0_25, %c8_26] : memref<8x32xbf16, #tpu.memory_space<vmem>>, vector<8x8xbf16>
    tpu.vector_store %arg21[%c0_25, %c8_26], %48 {strides = array<i32>} : memref<8x32xbf16, #tpu.memory_space<vmem>>, vector<8x8xbf16>,
    %50 = vector.extract_strided_slice %13 {offsets = [0, 16], sizes = [8, 8], strides = [1, 1]} : vector<8x32xbf16> to vector<8x8xbf16>
    %c16 = arith.constant 16 : index
    %c0_27 = arith.constant 0 : index
    %51 = vector.load %arg19[%c16, %c0_27] : memref<32x8xbf16, #tpu.memory_space<vmem>>, vector<8x8xbf16>
    %cst_28 = arith.constant dense<0.000000e+00> : vector<8x8xf32>
    %52 = tpu.matmul %50, %51, %cst_28 {dimension_numbers = #tpu.dot_dimension_numbers<[1], [0], [0], [1], [0, 0, 1, 1], [], []>} : vector<8x8xbf16>, vector<8x8xbf16>, vector<8x8xf32> -> vector<8x8xf32>
    %cst_29 = arith.constant dense<0xFF800000> : vector<8xf32>
    %53 = vector.multi_reduction <maximumf>, %52, %cst_29 [1] : vector<8x8xf32> to vector<8xf32>
    %54 = vector.shape_cast %53 : vector<8xf32> to vector<8x1xf32>
    %55 = vector.broadcast %54 : vector<8x1xf32> to vector<8x8xf32>
    %56 = arith.subf %52, %55 : vector<8x8xf32>
    %57 = math.exp %56 : vector<8x8xf32>
    %cst_30 = arith.constant dense<0.000000e+00> : vector<8xf32>
    %58 = vector.multi_reduction <add>, %57, %cst_30 [1] : vector<8x8xf32> to vector<8xf32>
    %59 = vector.shape_cast %58 : vector<8xf32> to vector<8x1xf32>
    %60 = tpu.reciprocal %59 {approx = true} : vector<8x1xf32> -> vector<8x1xf32>
    %61 = vector.broadcast %60 : vector<8x1xf32> to vector<8x8xf32>
    %62 = arith.mulf %57, %61 : vector<8x8xf32>
    %63 = arith.truncf %62 : vector<8x8xf32> to vector<8x8xbf16>
    %c0_31 = arith.constant 0 : index
    %c16_32 = arith.constant 16 : index
    %64 = vector.load %arg20[%c0_31, %c16_32] : memref<8x32xbf16, #tpu.memory_space<vmem>>, vector<8x8xbf16>
    %cst_33 = arith.constant dense<0.000000e+00> : vector<8x8xf32>
    %65 = tpu.matmul %63, %64, %cst_33 {dimension_numbers = #tpu.dot_dimension_numbers<[1], [0], [0], [1], [0, 0, 1, 1], [], []>} : vector<8x8xbf16>, vector<8x8xbf16>, vector<8x8xf32> -> vector<8x8xf32>
    %66 = arith.truncf %65 : vector<8x8xf32> to vector<8x8xbf16>
    %c0_34 = arith.constant 0 : index
    %c16_35 = arith.constant 16 : index
    %67 = vector.load %arg21[%c0_34, %c16_35] : memref<8x32xbf16, #tpu.memory_space<vmem>>, vector<8x8xbf16>
    tpu.vector_store %arg21[%c0_34, %c16_35], %66 {strides = array<i32>} : memref<8x32xbf16, #tpu.memory_space<vmem>>, vector<8x8xbf16>,
    %68 = vector.extract_strided_slice %13 {offsets = [0, 24], sizes = [8, 8], strides = [1, 1]} : vector<8x32xbf16> to vector<8x8xbf16>
    %c24 = arith.constant 24 : index
    %c0_36 = arith.constant 0 : index
    %69 = vector.load %arg19[%c24, %c0_36] : memref<32x8xbf16, #tpu.memory_space<vmem>>, vector<8x8xbf16>
    %cst_37 = arith.constant dense<0.000000e+00> : vector<8x8xf32>
    %70 = tpu.matmul %68, %69, %cst_37 {dimension_numbers = #tpu.dot_dimension_numbers<[1], [0], [0], [1], [0, 0, 1, 1], [], []>} : vector<8x8xbf16>, vector<8x8xbf16>, vector<8x8xf32> -> vector<8x8xf32>
    %cst_38 = arith.constant dense<0xFF800000> : vector<8xf32>
    %71 = vector.multi_reduction <maximumf>, %70, %cst_38 [1] : vector<8x8xf32> to vector<8xf32>
    %72 = vector.shape_cast %71 : vector<8xf32> to vector<8x1xf32>
    %73 = vector.broadcast %72 : vector<8x1xf32> to vector<8x8xf32>
    %74 = arith.subf %70, %73 : vector<8x8xf32>
    %75 = math.exp %74 : vector<8x8xf32>
    %cst_39 = arith.constant dense<0.000000e+00> : vector<8xf32>
    %76 = vector.multi_reduction <add>, %75, %cst_39 [1] : vector<8x8xf32> to vector<8xf32>
    %77 = vector.shape_cast %76 : vector<8xf32> to vector<8x1xf32>
    %78 = tpu.reciprocal %77 {approx = true} : vector<8x1xf32> -> vector<8x1xf32>
    %79 = vector.broadcast %78 : vector<8x1xf32> to vector<8x8xf32>
    %80 = arith.mulf %75, %79 : vector<8x8xf32>
    %81 = arith.truncf %80 : vector<8x8xf32> to vector<8x8xbf16>
    %c0_40 = arith.constant 0 : index
    %c24_41 = arith.constant 24 : index
    %82 = vector.load %arg20[%c0_40, %c24_41] : memref<8x32xbf16, #tpu.memory_space<vmem>>, vector<8x8xbf16>
    %cst_42 = arith.constant dense<0.000000e+00> : vector<8x8xf32>
    %83 = tpu.matmul %81, %82, %cst_42 {dimension_numbers = #tpu.dot_dimension_numbers<[1], [0], [0], [1], [0, 0, 1, 1], [], []>} : vector<8x8xbf16>, vector<8x8xbf16>, vector<8x8xf32> -> vector<8x8xf32>
    %84 = arith.truncf %83 : vector<8x8xf32> to vector<8x8xbf16>
    %c0_43 = arith.constant 0 : index
    %c24_44 = arith.constant 24 : index
    %85 = vector.load %arg21[%c0_43, %c24_44] : memref<8x32xbf16, #tpu.memory_space<vmem>>, vector<8x8xbf16>
    tpu.vector_store %arg21[%c0_43, %c24_44], %84 {strides = array<i32>} : memref<8x32xbf16, #tpu.memory_space<vmem>>, vector<8x8xbf16>,
    %c0_45 = arith.constant 0 : index
    %c0_46 = arith.constant 0 : index
    %86 = vector.load %arg21[%c0_45, %c0_46] : memref<8x32xbf16, #tpu.memory_space<vmem>>, vector<8x32xbf16>
    %c0_47 = arith.constant 0 : index
    %c0_48 = arith.constant 0 : index
    %87 = vector.load %arg8[%c0_47, %c0_48] : memref<32x32xbf16, #tpu.memory_space<vmem>>, vector<32x32xbf16>
    %cst_49 = arith.constant dense<0.000000e+00> : vector<8x32xf32>
    %88 = tpu.matmul %86, %87, %cst_49 {dimension_numbers = #tpu.dot_dimension_numbers<[1], [0], [0], [1], [0, 0, 1, 1], [], []>} : vector<8x32xbf16>, vector<32x32xbf16>, vector<8x32xf32> -> vector<8x32xf32>
    %c0_50 = arith.constant 0 : index
    %c0_51 = arith.constant 0 : index
    %89 = vector.load %arg9[%c0_50, %c0_51] : memref<1x32xf32, #tpu.memory_space<vmem>>, vector<1x32xf32>
    %90 = vector.broadcast %89 : vector<1x32xf32> to vector<8x32xf32>
    %91 = arith.addf %88, %90 : vector<8x32xf32>
    %92 = arith.addf %4, %91 : vector<8x32xf32>
    %c0_52 = arith.constant 0 : index
    %c0_53 = arith.constant 0 : index
    %93 = vector.load %arg10[%c0_52, %c0_53] : memref<1x32xf32, #tpu.memory_space<vmem>>, vector<1x32xf32>
    %c0_54 = arith.constant 0 : index
    %c0_55 = arith.constant 0 : index
    %94 = vector.load %arg11[%c0_54, %c0_55] : memref<1x32xf32, #tpu.memory_space<vmem>>, vector<1x32xf32>
    %cst_56 = arith.constant dense<0.000000e+00> : vector<8xf32>
    %95 = vector.multi_reduction <add>, %92, %cst_56 [1] : vector<8x32xf32> to vector<8xf32>
    %96 = vector.shape_cast %95 : vector<8xf32> to vector<8x1xf32>
    %cst_57 = arith.constant 3.200000e+01 : f32
    %97 = vector.broadcast %cst_57 : f32 to vector<8x1xf32>
    %98 = arith.divf %96, %97 : vector<8x1xf32>
    %99 = vector.broadcast %98 : vector<8x1xf32> to vector<8x32xf32>
    %100 = arith.subf %92, %99 : vector<8x32xf32>
    %101 = arith.mulf %100, %100 : vector<8x32xf32>
    %cst_58 = arith.constant dense<0.000000e+00> : vector<8xf32>
    %102 = vector.multi_reduction <add>, %101, %cst_58 [1] : vector<8x32xf32> to vector<8xf32>
    %103 = vector.shape_cast %102 : vector<8xf32> to vector<8x1xf32>
    %cst_59 = arith.constant 3.200000e+01 : f32
    %104 = vector.broadcast %cst_59 : f32 to vector<8x1xf32>
    %105 = arith.divf %103, %104 : vector<8x1xf32>
    %106 = vector.broadcast %98 : vector<8x1xf32> to vector<8x32xf32>
    %107 = arith.subf %92, %106 : vector<8x32xf32>
    %cst_60 = arith.constant 9.99999974E-6 : f32
    %108 = vector.broadcast %cst_60 : f32 to vector<8x1xf32>
    %109 = arith.addf %105, %108 : vector<8x1xf32>
    %110 = math.rsqrt %109 : vector<8x1xf32>
    %111 = vector.broadcast %110 : vector<8x1xf32> to vector<8x32xf32>
    %112 = arith.mulf %107, %111 : vector<8x32xf32>
    %113 = vector.broadcast %93 : vector<1x32xf32> to vector<8x32xf32>
    %114 = arith.mulf %112, %113 : vector<8x32xf32>
    %115 = vector.broadcast %94 : vector<1x32xf32> to vector<8x32xf32>
    %116 = arith.addf %114, %115 : vector<8x32xf32>
    %117 = arith.truncf %116 : vector<8x32xf32> to vector<8x32xbf16>
    %c0_61 = arith.constant 0 : index
    %c0_62 = arith.constant 0 : index
    %118 = vector.load %arg12[%c0_61, %c0_62] : memref<32x64xbf16, #tpu.memory_space<vmem>>, vector<32x64xbf16>
    %cst_63 = arith.constant dense<0.000000e+00> : vector<8x64xf32>
    %119 = tpu.matmul %117, %118, %cst_63 {dimension_numbers = #tpu.dot_dimension_numbers<[1], [0], [0], [1], [0, 0, 1, 1], [], []>} : vector<8x32xbf16>, vector<32x64xbf16>, vector<8x64xf32> -> vector<8x64xf32>
    %c0_64 = arith.constant 0 : index
    %c0_65 = arith.constant 0 : index
    %120 = vector.load %arg13[%c0_64, %c0_65] : memref<1x64xf32, #tpu.memory_space<vmem>>, vector<1x64xf32>
    %121 = vector.broadcast %120 : vector<1x64xf32> to vector<8x64xf32>
    %122 = arith.addf %119, %121 : vector<8x64xf32>
    %cst_66 = arith.constant 0.000000e+00 : f32
    %123 = vector.broadcast %cst_66 : f32 to vector<8x64xf32>
    %124 = arith.maximumf %122, %123 : vector<8x64xf32>
    %125 = arith.truncf %124 : vector<8x64xf32> to vector<8x64xbf16>
    %c0_67 = arith.constant 0 : index
    %c0_68 = arith.constant 0 : index
    %126 = vector.load %arg14[%c0_67, %c0_68] : memref<64x32xbf16, #tpu.memory_space<vmem>>, vector<64x32xbf16>
    %cst_69 = arith.constant dense<0.000000e+00> : vector<8x32xf32>
    %127 = tpu.matmul %125, %126, %cst_69 {dimension_numbers = #tpu.dot_dimension_numbers<[1], [0], [0], [1], [0, 0, 1, 1], [], []>} : vector<8x64xbf16>, vector<64x32xbf16>, vector<8x32xf32> -> vector<8x32xf32>
    %c0_70 = arith.constant 0 : index
    %c0_71 = arith.constant 0 : index
    %128 = vector.load %arg15[%c0_70, %c0_71] : memref<1x32xf32, #tpu.memory_space<vmem>>, vector<1x32xf32>
    %129 = vector.broadcast %128 : vector<1x32xf32> to vector<8x32xf32>
    %130 = arith.addf %127, %129 : vector<8x32xf32>
    %131 = arith.addf %116, %130 : vector<8x32xf32>
    %c0_72 = arith.constant 0 : index
    %c0_73 = arith.constant 0 : index
    %132 = vector.load %arg16[%c0_72, %c0_73] : memref<1x32xf32, #tpu.memory_space<vmem>>, vector<1x32xf32>
    %c0_74 = arith.constant 0 : index
    %c0_75 = arith.constant 0 : index
    %133 = vector.load %arg17[%c0_74, %c0_75] : memref<1x32xf32, #tpu.memory_space<vmem>>, vector<1x32xf32>
    %cst_76 = arith.constant dense<0.000000e+00> : vector<8xf32>
    %134 = vector.multi_reduction <add>, %131, %cst_76 [1] : vector<8x32xf32> to vector<8xf32>
    %135 = vector.shape_cast %134 : vector<8xf32> to vector<8x1xf32>
    %cst_77 = arith.constant 3.200000e+01 : f32
    %136 = vector.broadcast %cst_77 : f32 to vector<8x1xf32>
    %137 = arith.divf %135, %136 : vector<8x1xf32>
    %138 = vector.broadcast %137 : vector<8x1xf32> to vector<8x32xf32>
    %139 = arith.subf %131, %138 : vector<8x32xf32>
    %140 = arith.mulf %139, %139 : vector<8x32xf32>
    %cst_78 = arith.constant dense<0.000000e+00> : vector<8xf32>
    %141 = vector.multi_reduction <add>, %140, %cst_78 [1] : vector<8x32xf32> to vector<8xf32>
    %142 = vector.shape_cast %141 : vector<8xf32> to vector<8x1xf32>
    %cst_79 = arith.constant 3.200000e+01 : f32
    %143 = vector.broadcast %cst_79 : f32 to vector<8x1xf32>
    %144 = arith.divf %142, %143 : vector<8x1xf32>
    %145 = vector.broadcast %137 : vector<8x1xf32> to vector<8x32xf32>
    %146 = arith.subf %131, %145 : vector<8x32xf32>
    %cst_80 = arith.constant 9.99999974E-6 : f32
    %147 = vector.broadcast %cst_80 : f32 to vector<8x1xf32>
    %148 = arith.addf %144, %147 : vector<8x1xf32>
    %149 = math.rsqrt %148 : vector<8x1xf32>
    %150 = vector.broadcast %149 : vector<8x1xf32> to vector<8x32xf32>
    %151 = arith.mulf %146, %150 : vector<8x32xf32>
    %152 = vector.broadcast %132 : vector<1x32xf32> to vector<8x32xf32>
    %153 = arith.mulf %151, %152 : vector<8x32xf32>
    %154 = vector.broadcast %133 : vector<1x32xf32> to vector<8x32xf32>
    %155 = arith.addf %153, %154 : vector<8x32xf32>
    %c0_81 = arith.constant 0 : index
    %c0_82 = arith.constant 0 : index
    %c0_83 = arith.constant 0 : index
    %156 = vector.load %arg18[%c0_81, %c0_82, %c0_83] : memref<1x8x32xf32, #tpu.memory_space<vmem>>, vector<1x8x32xf32>
    %157 = vector.shape_cast %156 : vector<1x8x32xf32> to vector<8x32xf32>
    %158 = vector.shape_cast %155 : vector<8x32xf32> to vector<1x8x32xf32>
    tpu.vector_store %arg18[%c0_81, %c0_82, %c0_83], %158 {strides = array<i32>} : memref<1x8x32xf32, #tpu.memory_space<vmem>>, vector<1x8x32xf32>,
    return
  }
  func.func @transform_0(%arg0: i32, %arg1: i32) -> (i32, i32, i32) {
    %c0_i32 = arith.constant 0 : i32
    %c0_i32_0 = arith.constant 0 : i32
    return %arg0, %arg1, %c0_i32 : i32, i32, i32
  }
  func.func @transform_1(%arg0: i32, %arg1: i32) -> (i32, i32, i32) {
    %c0_i32 = arith.constant 0 : i32
    %c0_i32_0 = arith.constant 0 : i32
    %c0_i32_1 = arith.constant 0 : i32
    return %arg0, %c0_i32, %c0_i32_0 : i32, i32, i32
  }
  func.func @transform_2(%arg0: i32, %arg1: i32) -> (i32, i32) {
    %c0_i32 = arith.constant 0 : i32
    %c0_i32_0 = arith.constant 0 : i32
    %c0_i32_1 = arith.constant 0 : i32
    return %c0_i32, %c0_i32_0 : i32, i32
  }
  func.func @transform_3(%arg0: i32, %arg1: i32) -> (i32, i32) {
    %c0_i32 = arith.constant 0 : i32
    %c0_i32_0 = arith.constant 0 : i32
    %c0_i32_1 = arith.constant 0 : i32
    return %c0_i32, %c0_i32_0 : i32, i32
  }
  func.func @transform_4(%arg0: i32, %arg1: i32) -> (i32, i32) {
    %c0_i32 = arith.constant 0 : i32
    %c0_i32_0 = arith.constant 0 : i32
    %c0_i32_1 = arith.constant 0 : i32
    return %c0_i32, %c0_i32_0 : i32, i32
  }
  func.func @transform_5(%arg0: i32, %arg1: i32) -> (i32, i32) {
    %c0_i32 = arith.constant 0 : i32
    %c0_i32_0 = arith.constant 0 : i32
    %c0_i32_1 = arith.constant 0 : i32
    return %c0_i32, %c0_i32_0 : i32, i32
  }
  func.func @transform_6(%arg0: i32, %arg1: i32) -> (i32, i32) {
    %c0_i32 = arith.constant 0 : i32
    %c0_i32_0 = arith.constant 0 : i32
    %c0_i32_1 = arith.constant 0 : i32
    return %c0_i32, %c0_i32_0 : i32, i32
  }
  func.func @transform_7(%arg0: i32, %arg1: i32) -> (i32, i32) {
    %c0_i32 = arith.constant 0 : i32
    %c0_i32_0 = arith.constant 0 : i32
    %c0_i32_1 = arith.constant 0 : i32
    return %c0_i32, %c0_i32_0 : i32, i32
  }
  func.func @transform_8(%arg0: i32, %arg1: i32) -> (i32, i32) {
    %c0_i32 = arith.constant 0 : i32
    %c0_i32_0 = arith.constant 0 : i32
    %c0_i32_1 = arith.constant 0 : i32
    return %c0_i32, %c0_i32_0 : i32, i32
  }
  func.func @transform_9(%arg0: i32, %arg1: i32) -> (i32, i32) {
    %c0_i32 = arith.constant 0 : i32
    %c0_i32_0 = arith.constant 0 : i32
    %c0_i32_1 = arith.constant 0 : i32
    return %c0_i32, %c0_i32_0 : i32, i32
  }
  func.func @transform_10(%arg0: i32, %arg1: i32) -> (i32, i32) {
    %c0_i32 = arith.constant 0 : i32
    %c0_i32_0 = arith.constant 0 : i32
    %c0_i32_1 = arith.constant 0 : i32
    return %c0_i32, %c0_i32_0 : i32, i32
  }
  func.func @transform_11(%arg0: i32, %arg1: i32) -> (i32, i32) {
    %c0_i32 = arith.constant 0 : i32
    %c0_i32_0 = arith.constant 0 : i32
    %c0_i32_1 = arith.constant 0 : i32
    return %c0_i32, %c0_i32_0 : i32, i32
  }
  func.func @transform_12(%arg0: i32, %arg1: i32) -> (i32, i32) {
    %c0_i32 = arith.constant 0 : i32
    %c0_i32_0 = arith.constant 0 : i32
    %c0_i32_1 = arith.constant 0 : i32
    return %c0_i32, %c0_i32_0 : i32, i32
  }
  func.func @transform_13(%arg0: i32, %arg1: i32) -> (i32, i32) {
    %c0_i32 = arith.constant 0 : i32
    %c0_i32_0 = arith.constant 0 : i32
    %c0_i32_1 = arith.constant 0 : i32
    return %c0_i32, %c0_i32_0 : i32, i32
  }
  func.func @transform_14(%arg0: i32, %arg1: i32) -> (i32, i32) {
    %c0_i32 = arith.constant 0 : i32
    %c0_i32_0 = arith.constant 0 : i32
    %c0_i32_1 = arith.constant 0 : i32
    return %c0_i32, %c0_i32_0 : i32, i32
  }
  func.func @transform_15(%arg0: i32, %arg1: i32) -> (i32, i32) {
    %c0_i32 = arith.constant 0 : i32
    %c0_i32_0 = arith.constant 0 : i32
    %c0_i32_1 = arith.constant 0 : i32
    return %c0_i32, %c0_i32_0 : i32, i32
  }
  func.func @transform_16(%arg0: i32, %arg1: i32) -> (i32, i32, i32) {
    %c0_i32 = arith.constant 0 : i32
    %c0_i32_0 = arith.constant 0 : i32
    return %arg0, %arg1, %c0_i32 : i32, i32, i32
  }
}

</mosaic_0001>

<llo_original>
// kernel: tpu_custom_call.1
$region0: #{tpu_custom_call.1}
  #allocation0 [shape = 'u32[]', space=smem, size = 0x4, offset = 0x4, fixed_abs, tag = 'smem constant byte address 0x4 - core index']
  #allocation1 [shape = 'u32[144,128]{1,0:T(1,128)}', space=vmem, size = 0x12000, scoped, tag = 'internal scratch']
  #allocation2 [shape = 'bf16[32,8]{1,0:T(8,128)(2,1)}', space=vmem, size = 0x2000, scoped, tag = 'scratch operand']
  #allocation3 [shape = 'bf16[8,32]{1,0:T(8,128)(2,1)}', space=vmem, size = 0x800, scoped, tag = 'scratch operand']
  #allocation4 [shape = 'bf16[8,32]{1,0:T(8,128)(2,1)}', space=vmem, size = 0x800, scoped, tag = 'scratch operand']
  %s0 = inlined_call_operand.vmem [shape: f32[2,8,32], index: 0, kind: input, shape index: {}]
  %s1 = inlined_call_operand.hbm [shape: bf16[2,8,32], index: 1, kind: input, shape index: {}]
  %s2 = inlined_call_operand.vmem [shape: bf16[32,32], index: 2, kind: input, shape index: {}]
  %s3 = inlined_call_operand.vmem [shape: f32[1,32], index: 3, kind: input, shape index: {}]
  %s4 = inlined_call_operand.vmem [shape: bf16[32,64], index: 4, kind: input, shape index: {}]
  %s5 = inlined_call_operand.vmem [shape: f32[1,64], index: 5, kind: input, shape index: {}]
  %s6 = inlined_call_operand.hbm [shape: bf16[32,32], index: 6, kind: input, shape index: {}]
  %s7 = inlined_call_operand.vmem [shape: f32[1,32], index: 7, kind: input, shape index: {}]
  %s8 = inlined_call_operand.vmem [shape: f32[1,32], index: 8, kind: input, shape index: {}]
  %s9 = inlined_call_operand.vmem [shape: f32[1,32], index: 9, kind: input, shape index: {}]
  %s10 = inlined_call_operand.hbm [shape: bf16[32,64], index: 10, kind: input, shape index: {}]
  %s11 = inlined_call_operand.hbm [shape: f32[1,64], index: 11, kind: input, shape index: {}]
  %s12 = inlined_call_operand.vmem [shape: bf16[64,32], index: 12, kind: input, shape index: {}]
  %s13 = inlined_call_operand.vmem [shape: f32[1,32], index: 13, kind: input, shape index: {}]
  %s14 = inlined_call_operand.vmem [shape: f32[1,32], index: 14, kind: input, shape index: {}]
  %s15 = inlined_call_operand.vmem [shape: f32[1,32], index: 15, kind: input, shape index: {}]
  %s16 = inlined_call_operand.hbm [shape: f32[2,8,32], index: 16, kind: output, shape index: {}]
  %s17 = sld [smem:[#allocation0]]
  $region117: #{tpu_custom_call.1} parent=0
    _
  %s19 = ssub.s32 1, %s17
  %s20 = scalar_select 0, %s19, %s17
  $region1: #{tpu_custom_call.1} parent=0
    #allocation5 [shape = 'u8[4096]{0}', space=vmem, size = 0x1000, scoped, tag = 'input window, operand 1']
    #allocation6 [shape = 's32[2]{0}', space=sflag, size = 0x8, scoped, tag = 'scoped memory for tpu_custom_call.1']
    #allocation7 [shape = 's32[2]{0}', space=sflag, size = 0x8, scoped, tag = 'scoped memory for tpu_custom_call.1']
    #allocation8 [shape = 'u8[8192]{0}', space=vmem, size = 0x2000, scoped, tag = 'input window, operand 6, single buffered']
    #allocation9 [shape = 's32[1]{0}', space=sflag, size = 0x4, scoped, tag = 'scoped memory for tpu_custom_call.1']
    #allocation10 [shape = 'u8[8192]{0}', space=vmem, size = 0x2000, scoped, tag = 'input window, operand 10, single buffered']
    #allocation11 [shape = 'u8[512]{0}', space=vmem, size = 0x400, scoped, tag = 'input window, operand 11, single buffered']
    #allocation12 [shape = 's32[1]{0}', space=sflag, size = 0x4, scoped, tag = 'scoped memory for tpu_custom_call.1']
    #allocation13 [shape = 'u8[8192]{0}', space=vmem, size = 0x2000, scoped, tag = 'output window, operand 0']
    %21 = vsyncpa [#allocation6], 0
    %s22 = scalar_lea.sflag [#allocation6], 1
    %23 = vsyncpa %s22, 0
    %24 = vsyncpa [#allocation9], 0
    %25 = vsyncpa [#allocation12], 0
    %26 = vsyncpa [#allocation7], 0
    %s27 = scalar_lea.sflag [#allocation7], 1
    %28 = vsyncpa %s27, 0
    loop: start=0, step=1, limit=4
    $region2: #{tpu_custom_call.1} parent=1 // loop_pre_header
      _
    $region3: #{tpu_custom_call.1} parent=1 // loop_header
      %s30 = sphi 0, %s34
      %p31 = scmp.ge.s32.totalorder %s30, 4
      %s37 = sphi 0, %s49
      %s38 = sphi 0, %s45
      %s39 = sphi 0, %s37
      %s40 = sphi 0, %s38
      %s41 = sphi 0, %s39
      %s42 = sphi 0, %s40
      %s54 = sphi 0, %s56
      %s57 = sphi 0, %s54
      %s58 = sphi 0, %s57
      %s74 = sphi 0, %s58
      %s80 = sphi 0, %s82
      %s83 = sphi 0, %s80
      %s84 = sphi 0, %s83
      %s100 = sphi 0, %s84
      %s104 = sphi 0, %s104
      %s106 = sphi 0, %s104
      %s107 = sphi 0, %s106
      %s121 = sphi 0, %s107
      %s125 = sphi 0, %s125
      %s127 = sphi 0, %s125
      %s128 = sphi 0, %s127
      %s142 = sphi 0, %s128
      %s146 = sphi 0, %s146
      %s148 = sphi 0, %s146
      %s149 = sphi 0, %s148
      %s163 = sphi 0, %s149
      %s167 = sphi 0, %s167
      %s169 = sphi 0, %s167
      %s170 = sphi 0, %s169
      %s184 = sphi 0, %s170
      %s188 = sphi 0, %s188
      %s190 = sphi 0, %s188
      %s191 = sphi 0, %s190
      %s205 = sphi 0, %s191
      %s209 = sphi 0, %s209
      %s211 = sphi 0, %s209
      %s212 = sphi 0, %s211
      %s226 = sphi 0, %s212
      %s230 = sphi 0, %s230
      %s232 = sphi 0, %s230
      %s233 = sphi 0, %s232
      %s247 = sphi 0, %s233
      %s251 = sphi 0, %s251
      %s253 = sphi 0, %s251
      %s254 = sphi 0, %s253
      %s268 = sphi 0, %s254
      %s272 = sphi 0, %s272
      %s274 = sphi 0, %s272
      %s275 = sphi 0, %s274
      %s289 = sphi 0, %s275
      %s293 = sphi 0, %s293
      %s295 = sphi 0, %s293
      %s296 = sphi 0, %s295
      %s310 = sphi 0, %s296
      %s314 = sphi 0, %s314
      %s316 = sphi 0, %s314
      %s317 = sphi 0, %s316
      %s331 = sphi 0, %s317
      %s335 = sphi 0, %s335
      %s337 = sphi 0, %s335
      %s338 = sphi 0, %s337
      %s352 = sphi 0, %s338
      %s356 = sphi 0, %s356
      %s358 = sphi 0, %s356
      %s359 = sphi 0, %s358
      %s373 = sphi 0, %s359
      %s377 = sphi 0, %s377
      %s379 = sphi 0, %s377
      %s380 = sphi 0, %s379
      %s394 = sphi 0, %s380
      %s402 = sphi 0, %s404
      %s405 = sphi 0, %s402
      %s406 = sphi 0, %s405
      %s422 = sphi 0, %s406
    $region4: #{tpu_custom_call.1} parent=1 // loop_header_branch
      %33 = sbr.rel (%p31) target = $region8
    $region5: #{tpu_custom_call.1} parent=1 // loop_body
      %s35 = ssub.s32 %s30, 1
      %s36 = ssub.s32 %s30, 2
      %s43 = sadd.s32 1, %s38
      %p44 = scmp.ge.s32.totalorder %s43, 1
      %s45 = scalar_select %p44, 0, %s43
      %s46 = sadd.s32 1, %s37
      %s47 = scalar_select %p44, %s46, %s37
      %p48 = scmp.ge.s32.totalorder %s47, 2
      %s49 = scalar_select %p48, 0, %s47
      %s50 = ssub.s32 %s37, %s49
      %s51 = ssub.s32 %s38, %s45
      %s52 = sor.u32 %s50, %s51
      %p53 = scmp.eq.s32.totalorder %s52, 0
      %s55 = sadd.s32 %s54, 1
      %s56 = scalar_select %p53, %s54, %s55
      %p59 = pneg %p53
      %p60 = scmp.eq.s32.totalorder %s30, 1
      %p61 = por %p59, %p60
      %p62 = scmp.ne.s32.totalorder %s54, %s57
      %p63 = scmp.eq.s32.totalorder %s30, 0
      %p64 = por %p62, %p63
      %p65 = scmp.ne.s32.totalorder %s54, %s57
      %p66 = scmp.eq.s32.totalorder %s35, 1
      %p67 = por %p65, %p66
      %p68 = scmp.ne.s32.totalorder %s57, %s58
      %p69 = scmp.eq.s32.totalorder %s35, 0
      %p70 = por %p68, %p69
      %p71 = scmp.ne.s32.totalorder %s57, %s58
      %p72 = scmp.eq.s32.totalorder %s36, 1
      %p73 = por %p71, %p72
      %p75 = scmp.ne.s32.totalorder %s58, %s74
      %p76 = scmp.eq.s32.totalorder %s36, 0
      %p77 = por %p75, %p76
      %s78 = ssub.s32 %s37, %s49
      %p79 = scmp.eq.s32.totalorder %s78, 0
      %s81 = sadd.s32 %s80, 1
      %s82 = scalar_select %p79, %s80, %s81
      %p85 = pneg %p79
      %p86 = scmp.eq.s32.totalorder %s30, 1
      %p87 = por %p85, %p86
      %p88 = scmp.ne.s32.totalorder %s80, %s83
      %p89 = scmp.eq.s32.totalorder %s30, 0
      %p90 = por %p88, %p89
      %p91 = scmp.ne.s32.totalorder %s80, %s83
      %p92 = scmp.eq.s32.totalorder %s35, 1
      %p93 = por %p91, %p92
      %p94 = scmp.ne.s32.totalorder %s83, %s84
      %p95 = scmp.eq.s32.totalorder %s35, 0
      %p96 = por %p94, %p95
      %p97 = scmp.ne.s32.totalorder %s83, %s84
      %p98 = scmp.eq.s32.totalorder %s36, 1
      %p99 = por %p97, %p98
      %p101 = scmp.ne.s32.totalorder %s84, %s100
      %p102 = scmp.eq.s32.totalorder %s36, 0
      %p103 = por %p101, %p102
      %s105 = sadd.s32 %s104, 1
      %p108 = scmp.eq.s32.totalorder %s30, 1
      %p109 = scmp.ne.s32.totalorder %s104, %s106
      %p110 = scmp.eq.s32.totalorder %s30, 0
      %p111 = por %p109, %p110
      %p112 = scmp.ne.s32.totalorder %s104, %s106
      %p113 = scmp.eq.s32.totalorder %s35, 1
      %p114 = por %p112, %p113
      %p115 = scmp.ne.s32.totalorder %s106, %s107
      %p116 = scmp.eq.s32.totalorder %s35, 0
      %p117 = por %p115, %p116
      %p118 = scmp.ne.s32.totalorder %s106, %s107
      %p119 = scmp.eq.s32.totalorder %s36, 1
      %p120 = por %p118, %p119
      %p122 = scmp.ne.s32.totalorder %s107, %s121
      %p123 = scmp.eq.s32.totalorder %s36, 0
      %p124 = por %p122, %p123
      %s126 = sadd.s32 %s125, 1
      %p129 = scmp.eq.s32.totalorder %s30, 1
      %p130 = scmp.ne.s32.totalorder %s125, %s127
      %p131 = scmp.eq.s32.totalorder %s30, 0
      %p132 = por %p130, %p131
      %p133 = scmp.ne.s32.totalorder %s125, %s127
      %p134 = scmp.eq.s32.totalorder %s35, 1
      %p135 = por %p133, %p134
      %p136 = scmp.ne.s32.totalorder %s127, %s128
      %p137 = scmp.eq.s32.totalorder %s35, 0
      %p138 = por %p136, %p137
      %p139 = scmp.ne.s32.totalorder %s127, %s128
      %p140 = scmp.eq.s32.totalorder %s36, 1
      %p141 = por %p139, %p140
      %p143 = scmp.ne.s32.totalorder %s128, %s142
      %p144 = scmp.eq.s32.totalorder %s36, 0
      %p145 = por %p143, %p144
      %s147 = sadd.s32 %s146, 1
      %p150 = scmp.eq.s32.totalorder %s30, 1
      %p151 = scmp.ne.s32.totalorder %s146, %s148
      %p152 = scmp.eq.s32.totalorder %s30, 0
      %p153 = por %p151, %p152
      %p154 = scmp.ne.s32.totalorder %s146, %s148
      %p155 = scmp.eq.s32.totalorder %s35, 1
      %p156 = por %p154, %p155
      %p157 = scmp.ne.s32.totalorder %s148, %s149
      %p158 = scmp.eq.s32.totalorder %s35, 0
      %p159 = por %p157, %p158
      %p160 = scmp.ne.s32.totalorder %s148, %s149
      %p161 = scmp.eq.s32.totalorder %s36, 1
      %p162 = por %p160, %p161
      %p164 = scmp.ne.s32.totalorder %s149, %s163
      %p165 = scmp.eq.s32.totalorder %s36, 0
      %p166 = por %p164, %p165
      %s168 = sadd.s32 %s167, 1
      %p171 = scmp.eq.s32.totalorder %s30, 1
      %p172 = scmp.ne.s32.totalorder %s167, %s169
      %p173 = scmp.eq.s32.totalorder %s30, 0
      %p174 = por %p172, %p173
      %p175 = scmp.ne.s32.totalorder %s167, %s169
      %p176 = scmp.eq.s32.totalorder %s35, 1
      %p177 = por %p175, %p176
      %p178 = scmp.ne.s32.totalorder %s169, %s170
      %p179 = scmp.eq.s32.totalorder %s35, 0
      %p180 = por %p178, %p179
      %p181 = scmp.ne.s32.totalorder %s169, %s170
      %p182 = scmp.eq.s32.totalorder %s36, 1
      %p183 = por %p181, %p182
      %p185 = scmp.ne.s32.totalorder %s170, %s184
      %p186 = scmp.eq.s32.totalorder %s36, 0
      %p187 = por %p185, %p186
      %s189 = sadd.s32 %s188, 1
      %p192 = scmp.eq.s32.totalorder %s30, 1
      %p193 = scmp.ne.s32.totalorder %s188, %s190
      %p194 = scmp.eq.s32.totalorder %s30, 0
      %p195 = por %p193, %p194
      %p196 = scmp.ne.s32.totalorder %s188, %s190
      %p197 = scmp.eq.s32.totalorder %s35, 1
      %p198 = por %p196, %p197
      %p199 = scmp.ne.s32.totalorder %s190, %s191
      %p200 = scmp.eq.s32.totalorder %s35, 0
      %p201 = por %p199, %p200
      %p202 = scmp.ne.s32.totalorder %s190, %s191
      %p203 = scmp.eq.s32.totalorder %s36, 1
      %p204 = por %p202, %p203
      %p206 = scmp.ne.s32.totalorder %s191, %s205
      %p207 = scmp.eq.s32.totalorder %s36, 0
      %p208 = por %p206, %p207
      %s210 = sadd.s32 %s209, 1
      %p213 = scmp.eq.s32.totalorder %s30, 1
      %p214 = scmp.ne.s32.totalorder %s209, %s211
      %p215 = scmp.eq.s32.totalorder %s30, 0
      %p216 = por %p214, %p215
      %p217 = scmp.ne.s32.totalorder %s209, %s211
      %p218 = scmp.eq.s32.totalorder %s35, 1
      %p219 = por %p217, %p218
      %p220 = scmp.ne.s32.totalorder %s211, %s212
      %p221 = scmp.eq.s32.totalorder %s35, 0
      %p222 = por %p220, %p221
      %p223 = scmp.ne.s32.totalorder %s211, %s212
      %p224 = scmp.eq.s32.totalorder %s36, 1
      %p225 = por %p223, %p224
      %p227 = scmp.ne.s32.totalorder %s212, %s226
      %p228 = scmp.eq.s32.totalorder %s36, 0
      %p229 = por %p227, %p228
      %s231 = sadd.s32 %s230, 1
      %p234 = scmp.eq.s32.totalorder %s30, 1
      %p235 = scmp.ne.s32.totalorder %s230, %s232
      %p236 = scmp.eq.s32.totalorder %s30, 0
      %p237 = por %p235, %p236
      %p238 = scmp.ne.s32.totalorder %s230, %s232
      %p239 = scmp.eq.s32.totalorder %s35, 1
      %p240 = por %p238, %p239
      %p241 = scmp.ne.s32.totalorder %s232, %s233
      %p242 = scmp.eq.s32.totalorder %s35, 0
      %p243 = por %p241, %p242
      %p244 = scmp.ne.s32.totalorder %s232, %s233
      %p245 = scmp.eq.s32.totalorder %s36, 1
      %p246 = por %p244, %p245
      %p248 = scmp.ne.s32.totalorder %s233, %s247
      %p249 = scmp.eq.s32.totalorder %s36, 0
      %p250 = por %p248, %p249
      %s252 = sadd.s32 %s251, 1
      %p255 = scmp.eq.s32.totalorder %s30, 1
      %p256 = scmp.ne.s32.totalorder %s251, %s253
      %p257 = scmp.eq.s32.totalorder %s30, 0
      %p258 = por %p256, %p257
      %p259 = scmp.ne.s32.totalorder %s251, %s253
      %p260 = scmp.eq.s32.totalorder %s35, 1
      %p261 = por %p259, %p260
      %p262 = scmp.ne.s32.totalorder %s253, %s254
      %p263 = scmp.eq.s32.totalorder %s35, 0
      %p264 = por %p262, %p263
      %p265 = scmp.ne.s32.totalorder %s253, %s254
      %p266 = scmp.eq.s32.totalorder %s36, 1
      %p267 = por %p265, %p266
      %p269 = scmp.ne.s32.totalorder %s254, %s268
      %p270 = scmp.eq.s32.totalorder %s36, 0
      %p271 = por %p269, %p270
      %s273 = sadd.s32 %s272, 1
      %p276 = scmp.eq.s32.totalorder %s30, 1
      %p277 = scmp.ne.s32.totalorder %s272, %s274
      %p278 = scmp.eq.s32.totalorder %s30, 0
      %p279 = por %p277, %p278
      %p280 = scmp.ne.s32.totalorder %s272, %s274
      %p281 = scmp.eq.s32.totalorder %s35, 1
      %p282 = por %p280, %p281
      %p283 = scmp.ne.s32.totalorder %s274, %s275
      %p284 = scmp.eq.s32.totalorder %s35, 0
      %p285 = por %p283, %p284
      %p286 = scmp.ne.s32.totalorder %s274, %s275
      %p287 = scmp.eq.s32.totalorder %s36, 1
      %p288 = por %p286, %p287
      %p290 = scmp.ne.s32.totalorder %s275, %s289
      %p291 = scmp.eq.s32.totalorder %s36, 0
      %p292 = por %p290, %p291
      %s294 = sadd.s32 %s293, 1
      %p297 = scmp.eq.s32.totalorder %s30, 1
      %p298 = scmp.ne.s32.totalorder %s293, %s295
      %p299 = scmp.eq.s32.totalorder %s30, 0
      %p300 = por %p298, %p299
      %p301 = scmp.ne.s32.totalorder %s293, %s295
      %p302 = scmp.eq.s32.totalorder %s35, 1
      %p303 = por %p301, %p302
      %p304 = scmp.ne.s32.totalorder %s295, %s296
      %p305 = scmp.eq.s32.totalorder %s35, 0
      %p306 = por %p304, %p305
      %p307 = scmp.ne.s32.totalorder %s295, %s296
      %p308 = scmp.eq.s32.totalorder %s36, 1
      %p309 = por %p307, %p308
      %p311 = scmp.ne.s32.totalorder %s296, %s310
      %p312 = scmp.eq.s32.totalorder %s36, 0
      %p313 = por %p311, %p312
      %s315 = sadd.s32 %s314, 1
      %p318 = scmp.eq.s32.totalorder %s30, 1
      %p319 = scmp.ne.s32.totalorder %s314, %s316
      %p320 = scmp.eq.s32.totalorder %s30, 0
      %p321 = por %p319, %p320
      %p322 = scmp.ne.s32.totalorder %s314, %s316
      %p323 = scmp.eq.s32.totalorder %s35, 1
      %p324 = por %p322, %p323
      %p325 = scmp.ne.s32.totalorder %s316, %s317
      %p326 = scmp.eq.s32.totalorder %s35, 0
      %p327 = por %p325, %p326
      %p328 = scmp.ne.s32.totalorder %s316, %s317
      %p329 = scmp.eq.s32.totalorder %s36, 1
      %p330 = por %p328, %p329
      %p332 = scmp.ne.s32.totalorder %s317, %s331
      %p333 = scmp.eq.s32.totalorder %s36, 0
      %p334 = por %p332, %p333
      %s336 = sadd.s32 %s335, 1
      %p339 = scmp.eq.s32.totalorder %s30, 1
      %p340 = scmp.ne.s32.totalorder %s335, %s337
      %p341 = scmp.eq.s32.totalorder %s30, 0
      %p342 = por %p340, %p341
      %p343 = scmp.ne.s32.totalorder %s335, %s337
      %p344 = scmp.eq.s32.totalorder %s35, 1
      %p345 = por %p343, %p344
      %p346 = scmp.ne.s32.totalorder %s337, %s338
      %p347 = scmp.eq.s32.totalorder %s35, 0
      %p348 = por %p346, %p347
      %p349 = scmp.ne.s32.totalorder %s337, %s338
      %p350 = scmp.eq.s32.totalorder %s36, 1
      %p351 = por %p349, %p350
      %p353 = scmp.ne.s32.totalorder %s338, %s352
      %p354 = scmp.eq.s32.totalorder %s36, 0
      %p355 = por %p353, %p354
      %s357 = sadd.s32 %s356, 1
      %p360 = scmp.eq.s32.totalorder %s30, 1
      %p361 = scmp.ne.s32.totalorder %s356, %s358
      %p362 = scmp.eq.s32.totalorder %s30, 0
      %p363 = por %p361, %p362
      %p364 = scmp.ne.s32.totalorder %s356, %s358
      %p365 = scmp.eq.s32.totalorder %s35, 1
      %p366 = por %p364, %p365
      %p367 = scmp.ne.s32.totalorder %s358, %s359
      %p368 = scmp.eq.s32.totalorder %s35, 0
      %p369 = por %p367, %p368
      %p370 = scmp.ne.s32.totalorder %s358, %s359
      %p371 = scmp.eq.s32.totalorder %s36, 1
      %p372 = por %p370, %p371
      %p374 = scmp.ne.s32.totalorder %s359, %s373
      %p375 = scmp.eq.s32.totalorder %s36, 0
      %p376 = por %p374, %p375
      %s378 = sadd.s32 %s377, 1
      %p381 = scmp.eq.s32.totalorder %s30, 1
      %p382 = scmp.ne.s32.totalorder %s377, %s379
      %p383 = scmp.eq.s32.totalorder %s30, 0
      %p384 = por %p382, %p383
      %p385 = scmp.ne.s32.totalorder %s377, %s379
      %p386 = scmp.eq.s32.totalorder %s35, 1
      %p387 = por %p385, %p386
      %p388 = scmp.ne.s32.totalorder %s379, %s380
      %p389 = scmp.eq.s32.totalorder %s35, 0
      %p390 = por %p388, %p389
      %p391 = scmp.ne.s32.totalorder %s379, %s380
      %p392 = scmp.eq.s32.totalorder %s36, 1
      %p393 = por %p391, %p392
      %p395 = scmp.ne.s32.totalorder %s380, %s394
      %p396 = scmp.eq.s32.totalorder %s36, 0
      %p397 = por %p395, %p396
      %s398 = ssub.s32 %s37, %s49
      %s399 = ssub.s32 %s38, %s45
      %s400 = sor.u32 %s398, %s399
      %p401 = scmp.eq.s32.totalorder %s400, 0
      %s403 = sadd.s32 %s402, 1
      %s404 = scalar_select %p401, %s402, %s403
      %p407 = pneg %p401
      %p408 = scmp.eq.s32.totalorder %s30, 1
      %p409 = por %p407, %p408
      %p410 = scmp.ne.s32.totalorder %s402, %s405
      %p411 = scmp.eq.s32.totalorder %s30, 0
      %p412 = por %p410, %p411
      %p413 = scmp.ne.s32.totalorder %s402, %s405
      %p414 = scmp.eq.s32.totalorder %s35, 1
      %p415 = por %p413, %p414
      %p416 = scmp.ne.s32.totalorder %s405, %s406
      %p417 = scmp.eq.s32.totalorder %s35, 0
      %p418 = por %p416, %p417
      %p419 = scmp.ne.s32.totalorder %s405, %s406
      %p420 = scmp.eq.s32.totalorder %s36, 1
      %p421 = por %p419, %p420
      %p423 = scmp.ne.s32.totalorder %s406, %s422
      %p424 = scmp.eq.s32.totalorder %s36, 0
      %p425 = por %p423, %p424
      %p426 = scmp.le.s32.totalorder 1, %s30
      %p427 = scmp.lt.s32.totalorder %s30, 3
      %p428 = pnand %p426, %p427
      %p429 = pneg %p428
      // Predicated region
      $region9: #{tpu_custom_call.1} parent=5 // pred_check
        _
      $region10: #{tpu_custom_call.1} parent=5 // pred_check_branch
        %431 = sbr.rel (%p428) target = $region12
      $region11: #{tpu_custom_call.1} parent=5 // pred_region
        %s432 = ssub.s32 %s30, 1
        // Predicated region
        $region13: #{tpu_custom_call.1} parent=11 // pred_check
          %p433 = pneg %p117
        $region14: #{tpu_custom_call.1} parent=11 // pred_check_branch
          %435 = sbr.rel (%p433) target = $region16
        $region15: #{tpu_custom_call.1} parent=11 // pred_region
          _
        $region16: #{tpu_custom_call.1} parent=11 // pred_fallthru
          _
        // Predicated region
        $region17: #{tpu_custom_call.1} parent=11 // pred_check
          %p436 = pneg %p138
        $region18: #{tpu_custom_call.1} parent=11 // pred_check_branch
          %438 = sbr.rel (%p436) target = $region20
        $region19: #{tpu_custom_call.1} parent=11 // pred_region
          _
        $region20: #{tpu_custom_call.1} parent=11 // pred_fallthru
          _
        // Predicated region
        $region21: #{tpu_custom_call.1} parent=11 // pred_check
          %p439 = pneg %p159
        $region22: #{tpu_custom_call.1} parent=11 // pred_check_branch
          %441 = sbr.rel (%p439) target = $region24
        $region23: #{tpu_custom_call.1} parent=11 // pred_region
          _
        $region24: #{tpu_custom_call.1} parent=11 // pred_fallthru
          _
        // Predicated region
        $region25: #{tpu_custom_call.1} parent=11 // pred_check
          %p442 = pneg %p180
        $region26: #{tpu_custom_call.1} parent=11 // pred_check_branch
          %444 = sbr.rel (%p442) target = $region28
        $region27: #{tpu_custom_call.1} parent=11 // pred_region
          _
        $region28: #{tpu_custom_call.1} parent=11 // pred_fallthru
          _
        // Predicated region
        $region29: #{tpu_custom_call.1} parent=11 // pred_check
          %p445 = pneg %p201
        $region30: #{tpu_custom_call.1} parent=11 // pred_check_branch
          %447 = sbr.rel (%p445) target = $region32
        $region31: #{tpu_custom_call.1} parent=11 // pred_region
          %s449 = ssub.s32 256, 256
          %450 = vsyncadd [#allocation9], %s449
          %s451 = sshll.u32 [#allocation8], 4
          %s452 = int_to_ptr.vmem [resolvable:$true] %s451
          %457 = dma.hbm_to_vmem [thread:$0]  %s6, 256, %s452, [#allocation9], 64, 64, 4
        $region32: #{tpu_custom_call.1} parent=11 // pred_fallthru
          _
        // Predicated region
        $region33: #{tpu_custom_call.1} parent=11 // pred_check
          %p458 = pneg %p222
        $region34: #{tpu_custom_call.1} parent=11 // pred_check_branch
          %460 = sbr.rel (%p458) target = $region36
        $region35: #{tpu_custom_call.1} parent=11 // pred_region
          _
        $region36: #{tpu_custom_call.1} parent=11 // pred_fallthru
          _
        // Predicated region
        $region37: #{tpu_custom_call.1} parent=11 // pred_check
          %p461 = pneg %p243
        $region38: #{tpu_custom_call.1} parent=11 // pred_check_branch
          %463 = sbr.rel (%p461) target = $region40
        $region39: #{tpu_custom_call.1} parent=11 // pred_region
          _
        $region40: #{tpu_custom_call.1} parent=11 // pred_fallthru
          _
        // Predicated region
        $region41: #{tpu_custom_call.1} parent=11 // pred_check
          %p464 = pneg %p264
        $region42: #{tpu_custom_call.1} parent=11 // pred_check_branch
          %466 = sbr.rel (%p464) target = $region44
        $region43: #{tpu_custom_call.1} parent=11 // pred_region
          _
        $region44: #{tpu_custom_call.1} parent=11 // pred_fallthru
          _
        // Predicated region
        $region45: #{tpu_custom_call.1} parent=11 // pred_check
          %p467 = pneg %p285
        $region46: #{tpu_custom_call.1} parent=11 // pred_check_branch
          %469 = sbr.rel (%p467) target = $region48
        $region47: #{tpu_custom_call.1} parent=11 // pred_region
          %s471 = ssub.s32 256, 256
          %472 = vsyncadd [#allocation9], %s471
          %s473 = sshll.u32 [#allocation10], 4
          %s474 = int_to_ptr.vmem [resolvable:$true] %s473
          %479 = dma.hbm_to_vmem [thread:$0]  %s10, 256, %s474, [#allocation9], 64, 64, 4
        $region48: #{tpu_custom_call.1} parent=11 // pred_fallthru
          _
        // Predicated region
        $region49: #{tpu_custom_call.1} parent=11 // pred_check
          %p480 = pneg %p306
        $region50: #{tpu_custom_call.1} parent=11 // pred_check_branch
          %482 = sbr.rel (%p480) target = $region52
        $region51: #{tpu_custom_call.1} parent=11 // pred_region
          %s484 = ssub.s32 16, 16
          %485 = vsyncadd [#allocation12], %s484
          %s487 = sshll.u32 [#allocation11], 4
          %s488 = int_to_ptr.vmem [resolvable:$true] %s487
          %490 = dma.hbm_to_vmem [thread:$0]  %s11, 16, %s488, [#allocation12]
        $region52: #{tpu_custom_call.1} parent=11 // pred_fallthru
          _
        // Predicated region
        $region53: #{tpu_custom_call.1} parent=11 // pred_check
          %p491 = pneg %p327
        $region54: #{tpu_custom_call.1} parent=11 // pred_check_branch
          %493 = sbr.rel (%p491) target = $region56
        $region55: #{tpu_custom_call.1} parent=11 // pred_region
          _
        $region56: #{tpu_custom_call.1} parent=11 // pred_fallthru
          _
        // Predicated region
        $region57: #{tpu_custom_call.1} parent=11 // pred_check
          %p494 = pneg %p348
        $region58: #{tpu_custom_call.1} parent=11 // pred_check_branch
          %496 = sbr.rel (%p494) target = $region60
        $region59: #{tpu_custom_call.1} parent=11 // pred_region
          _
        $region60: #{tpu_custom_call.1} parent=11 // pred_fallthru
          _
        // Predicated region
        $region61: #{tpu_custom_call.1} parent=11 // pred_check
          %p497 = pneg %p369
        $region62: #{tpu_custom_call.1} parent=11 // pred_check_branch
          %499 = sbr.rel (%p497) target = $region64
        $region63: #{tpu_custom_call.1} parent=11 // pred_region
          _
        $region64: #{tpu_custom_call.1} parent=11 // pred_fallthru
          _
        // Predicated region
        $region65: #{tpu_custom_call.1} parent=11 // pred_check
          %p500 = pneg %p390
        $region66: #{tpu_custom_call.1} parent=11 // pred_check_branch
          %502 = sbr.rel (%p500) target = $region68
        $region67: #{tpu_custom_call.1} parent=11 // pred_region
          _
        $region68: #{tpu_custom_call.1} parent=11 // pred_fallthru
          _
      $region12: #{tpu_custom_call.1} parent=5 // pred_fallthru
        _
      %p503 = scmp.lt.s32.totalorder %s30, 2
      // Predicated region
      $region69: #{tpu_custom_call.1} parent=5 // pred_check
        %p504 = pneg %p503
      $region70: #{tpu_custom_call.1} parent=5 // pred_check_branch
        %506 = sbr.rel (%p504) target = $region72
      $region71: #{tpu_custom_call.1} parent=5 // pred_region
        // Predicated region
        $region73: #{tpu_custom_call.1} parent=71 // pred_check
          %p507 = pneg %p64
        $region74: #{tpu_custom_call.1} parent=71 // pred_check_branch
          %509 = sbr.rel (%p507) target = $region76
        $region75: #{tpu_custom_call.1} parent=71 // pred_region
          %p510 = scmp.lt.s32.totalorder %s37, 1
          %s511 = scalar_select %p510, %s37, 1
          %p512 = scmp.lt.s32.totalorder %s38, 0
          %s513 = scalar_select %p512, %s38, 0
          %s514 = sadd.s32 %s513, %s511
          %s515 = smul.addr %s514, 8
          %s516 = scalar_lea.vmem %s0, %s515
        $region76: #{tpu_custom_call.1} parent=71 // pred_fallthru
          _
        // Predicated region
        $region77: #{tpu_custom_call.1} parent=71 // pred_check
          %p517 = pneg %p90
        $region78: #{tpu_custom_call.1} parent=71 // pred_check_branch
          %519 = sbr.rel (%p517) target = $region80
        $region79: #{tpu_custom_call.1} parent=71 // pred_region
          %s520 = sand.u32 %s80, 1
          %s521 = scalar_lea.sflag [#allocation6], %s520
          %s522 = sand.u32 %s80, 1
          %s523 = smul.addr %s522, 4
          %s524 = scalar_lea.vmem [#allocation5], %s523
          %s526 = ssub.s32 64, 64
          %527 = vsyncadd %s521, %s526
          %s528 = smul.addr %s37, 64
          %s529 = scalar_lea.hbm %s1, %s528
          %s531 = sshll.u32 %s524, 4
          %s532 = int_to_ptr.vmem [resolvable:$true] %s531
          %534 = dma.hbm_to_vmem [thread:$0]  %s529, 64, %s532, %s521
        $region80: #{tpu_custom_call.1} parent=71 // pred_fallthru
          _
      $region72: #{tpu_custom_call.1} parent=5 // pred_fallthru
        _
      %p535 = scmp.le.s32.totalorder 1, %s30
      %p536 = scmp.lt.s32.totalorder %s30, 3
      %p537 = pnand %p535, %p536
      %p538 = pneg %p537
      // Predicated region
      $region81: #{tpu_custom_call.1} parent=5 // pred_check
        _
      $region82: #{tpu_custom_call.1} parent=5 // pred_check_branch
        %540 = sbr.rel (%p537) target = $region84
      $region83: #{tpu_custom_call.1} parent=5 // pred_region
        %s541 = ssub.s32 %s30, 1
        %s542 = sand.u32 %s83, 1
        %s543 = scalar_lea.sflag [#allocation6], %s542
        %s544 = sand.u32 %s83, 1
        %s545 = smul.addr %s544, 4
        %s546 = scalar_lea.vmem [#allocation5], %s545
        // Predicated region
        $region85: #{tpu_custom_call.1} parent=83 // pred_check
          %p547 = pneg %p96
        $region86: #{tpu_custom_call.1} parent=83 // pred_check_branch
          %549 = sbr.rel (%p547) target = $region88
        $region87: #{tpu_custom_call.1} parent=83 // pred_region
          %550 = dma.done %s543, 64
        $region88: #{tpu_custom_call.1} parent=83 // pred_fallthru
          _
        // Predicated region
        $region89: #{tpu_custom_call.1} parent=83 // pred_check
          %p551 = pneg %p201
        $region90: #{tpu_custom_call.1} parent=83 // pred_check_branch
          %553 = sbr.rel (%p551) target = $region92
        $region91: #{tpu_custom_call.1} parent=83 // pred_region
          %554 = dma.done [#allocation9], 256
        $region92: #{tpu_custom_call.1} parent=83 // pred_fallthru
          _
        // Predicated region
        $region93: #{tpu_custom_call.1} parent=83 // pred_check
          %p555 = pneg %p285
        $region94: #{tpu_custom_call.1} parent=83 // pred_check_branch
          %557 = sbr.rel (%p555) target = $region96
        $region95: #{tpu_custom_call.1} parent=83 // pred_region
          %558 = dma.done [#allocation9], 256
        $region96: #{tpu_custom_call.1} parent=83 // pred_fallthru
          _
        // Predicated region
        $region97: #{tpu_custom_call.1} parent=83 // pred_check
          %p559 = pneg %p306
        $region98: #{tpu_custom_call.1} parent=83 // pred_check_branch
          %561 = sbr.rel (%p559) target = $region100
        $region99: #{tpu_custom_call.1} parent=83 // pred_region
          %562 = dma.done [#allocation12], 16
        $region100: #{tpu_custom_call.1} parent=83 // pred_fallthru
          _
        %p563 = scmp.lt.s32.totalorder %s39, 1
        %s564 = scalar_select %p563, %s39, 1
        %p565 = scmp.lt.s32.totalorder %s40, 0
        %s566 = scalar_select %p565, %s40, 0
        %s567 = sadd.s32 %s566, %s564
        %s568 = smul.addr %s567, 8
        %s569 = scalar_lea.vmem %s0, %s568
        %p570 = pneg %p70
        %p571 = pneg %p67
        %s572 = sand.u32 %s83, 1
        %s573 = scalar_lea.sflag [#allocation6], %s572
        %s574 = sand.u32 %s83, 1
        %s575 = smul.addr %s574, 4
        %s576 = scalar_lea.vmem [#allocation5], %s575
        %p577 = pneg %p96
        %p578 = pneg %p93
        %p579 = pneg %p117
        %p580 = pneg %p114
        %p581 = pneg %p138
        %p582 = pneg %p135
        %p583 = pneg %p159
        %p584 = pneg %p156
        %p585 = pneg %p180
        %p586 = pneg %p177
        %p587 = pneg %p201
        %p588 = pneg %p198
        %p589 = pneg %p222
        %p590 = pneg %p219
        %p591 = pneg %p243
        %p592 = pneg %p240
        %p593 = pneg %p264
        %p594 = pneg %p261
        %p595 = pneg %p285
        %p596 = pneg %p282
        %p597 = pneg %p306
        %p598 = pneg %p303
        %p599 = pneg %p327
        %p600 = pneg %p324
        %p601 = pneg %p348
        %p602 = pneg %p345
        %p603 = pneg %p369
        %p604 = pneg %p366
        %p605 = pneg %p390
        %p606 = pneg %p387
        %p607 = pneg %p418
        %p608 = pneg %p415
        %s609 = sand.u32 %s405, 1
        %s610 = scalar_lea.sflag [#allocation7], %s609
        %s611 = sand.u32 %s405, 1
        %s612 = smul.addr %s611, 8
        %s613 = scalar_lea.vmem [#allocation13], %s612
        %p614 = scmp.lt.s32.totalorder %s39, 1
        %s615 = scalar_select %p614, %s39, 1
        %p616 = scmp.lt.s32.totalorder %s40, 0
        %s617 = scalar_select %p616, %s40, 0
        %s618 = sadd.s32 %s617, %s615
        %s619 = smul.addr %s618, 8
        %s620 = scalar_lea.vmem %s0, %s619
        %p622 = scmp.eq.s32.totalorder %s40, 0
        // Predicated region
        $region101: #{tpu_custom_call.1} parent=83 // pred_check
          %p623 = pneg %p622
        $region102: #{tpu_custom_call.1} parent=83 // pred_check_branch
          %625 = sbr.rel (%p623) target = $region104
        $region103: #{tpu_custom_call.1} parent=83 // pred_region
          %v626 = vld [vmem:[%s546] sm:$0xf]
          %v627 = vld [vmem:[%s4] sm:$0xf]
          %v628 = vld [vmem:[%s4 + $0x4] sm:$0xf]
          %v629 = vld [vmem:[%s4 + $0x8] sm:$0xf]
          %v630 = vld [vmem:[%s4 + $0xc] sm:$0xf]
          %v631 = vld [vmem:[%s5] sm:$0x1]
          %v633 = vlaneseq
          %v634 = vshrl.u32 %v633, 7
          %v635 = vsub.s32 0, %v634
          %v636 = vrot.slane %v631, %v635
          %v642 = vunpack.c.l.b16 %v627
          %v643 = vunpack.c.l.b16 %v628
          %v644 = vunpack.c.l.b16 %v629
          %v645 = vunpack.c.l.b16 %v630
          %v646 = vpack.c.b16 %v643, %v642
          %v647 = vpack.c.b16 %v645, %v644
          %vm650 = vcmask 261120
          %v652 = vsel %vm650, %v626, 0
          %654 = vmatprep.subr.bf16.mxu0 0
          %655 = vmatpush1.bf16.msra.mxu0 0
          %656 = vmatprep.subr.bf16.mxu0 0
          %657 = vmatpush1.bf16.msra.mxu0 0
          %658 = vmatprep.subr.bf16.mxu0 0
          %659 = vmatpush1.bf16.msra.mxu0 0
          %660 = vmatprep.subr.bf16.mxu0 0
          %661 = vmatpush1.bf16.msra.mxu0 0
          %662 = vmatprep.subr.bf16.mxu0 0
          %663 = vmatpush1.bf16.msra.mxu0 0
          %664 = vmatprep.subr.bf16.mxu0 0
          %665 = vmatpush1.bf16.msra.mxu0 0
          %666 = vmatprep.subr.bf16.mxu0 0
          %667 = vmatpush1.bf16.msra.mxu0 %v647
          %668 = vmatprep.subr.bf16.mxu0 0
          %669 = vmatpush1.bf16.msra.mxu0 %v646
          %670 = vmatprep.subr.bf16.mxu0 0
          %671 = vmatpush2.bf16.msra.mxu0 0
          %672 = vmatprep.subr.bf16.mxu0 0
          %673 = vmatpush2.bf16.msra.mxu0 0
          %674 = vmatprep.subr.bf16.mxu0 0
          %675 = vmatpush2.bf16.msra.mxu0 0
          %676 = vmatprep.subr.bf16.mxu0 0
          %677 = vmatpush2.bf16.msra.mxu0 0
          %678 = vmatprep.subr.bf16.mxu0 0
          %679 = vmatpush2.bf16.msra.mxu0 0
          %680 = vmatprep.subr.bf16.mxu0 0
          %681 = vmatpush2.bf16.msra.mxu0 0
          %682 = vmatprep.subr.bf16.mxu0 0
          %683 = vmatpush2.bf16.msra.mxu0 0
          %684 = vmatprep.subr.bf16.mxu0 0
          %685 = vmatpush2.bf16.msra.mxu0 0
          %686 = vmatprep.mubr.bf16.mxu0 0
          %687 = vmatmul.mubr.bf16.gmra.mxu0 %v652
          %v688 = vpop.f32.mrf.mxu0
          %v689 = vadd.f32 %v636, %v688
          %v690 = vpop.f32.mrf.mxu0
          %v691 = vpop.f32.mrf.mxu0
          %v692 = vpop.f32.mrf.mxu0
          %693 = vdwg.mxu0
          %694 = vxpose.xlu0.b32.start [1/16] %v689, 128
          %695 = vxpose.xlu0.b32.cont [2/16] 0.0, 128
          %696 = vxpose.xlu0.b32.cont [3/16] 0.0, 128
          %697 = vxpose.xlu0.b32.cont [4/16] 0.0, 128
          %698 = vxpose.xlu0.b32.cont [5/16] 0.0, 128
          %699 = vxpose.xlu0.b32.cont [6/16] 0.0, 128
          %700 = vxpose.xlu0.b32.cont [7/16] 0.0, 128
          %701 = vxpose.xlu0.b32.cont [8/16] 0.0, 128
          %702 = vxpose.xlu0.b32.cont [9/16] 0.0, 128
          %703 = vxpose.xlu0.b32.cont [10/16] 0.0, 128
          %704 = vxpose.xlu0.b32.cont [11/16] 0.0, 128
          %705 = vxpose.xlu0.b32.cont [12/16] 0.0, 128
          %706 = vxpose.xlu0.b32.cont [13/16] 0.0, 128
          %707 = vxpose.xlu0.b32.cont [14/16] 0.0, 128
          %708 = vxpose.xlu0.b32.cont [15/16] 0.0, 128
          %709 = vxpose.xlu0.b32.end [16/16] 0.0, 128
          %v710 = vpop.trf.xlu0
          %v711 = vpop.trf.xlu0
          %v712 = vpop.trf.xlu0
          %v713 = vpop.trf.xlu0
          %v714 = vpop.trf.xlu0
          %v715 = vpop.trf.xlu0
          %v716 = vpop.trf.xlu0
          %v717 = vpop.trf.xlu0
          %v718 = vpop.trf.xlu0
          %v719 = vpop.trf.xlu0
          %v720 = vpop.trf.xlu0
          %v721 = vpop.trf.xlu0
          %v722 = vpop.trf.xlu0
          %v723 = vpop.trf.xlu0
          %v724 = vpop.trf.xlu0
          %v725 = vpop.trf.xlu0
          %v726 = vpack.c.bf16 %v711, %v710
          %v727 = vpack.c.bf16 %v713, %v712
          %v730 = vunpack.c.l.b16 %v726
          %v731 = vunpack.c.h.b16 %v726
          %v732 = vunpack.c.l.b16 %v727
          %v733 = vunpack.c.h.b16 %v727
          %v734 = vpack.c.b16 %v730, %v730
          %v735 = vpack.c.b16 %v731, %v731
          %v736 = vpack.c.b16 %v732, %v732
          %v737 = vpack.c.b16 %v733, %v733
          %vm742 = vcmask 60416
          %743 = vst.msk [vmem:[#allocation2] sm:$0xf] %vm742, %v734
          %744 = vst.msk [vmem:[#allocation2 + $0x4] sm:$0xf] %vm742, %v735
          %745 = vst.msk [vmem:[#allocation2 + $0x8] sm:$0xf] %vm742, %v736
          %746 = vst.msk [vmem:[#allocation2 + $0xc] sm:$0xf] %vm742, %v737
          %v747 = vpack.c.bf16 %v689, %v689
          %v749 = vunpack.c.l.b16 %v747
          %v750 = vpack.c.b16 %v749, %v749
          %751 = vrot.lane.b32.xlu0 %v750, 96
          %v752 = vpop.permute.xlu0 %751
          %vm754 = vcmask 257024
          %755 = vst.msk [vmem:[#allocation3] sm:$0xf] %vm754, %v752
        $region104: #{tpu_custom_call.1} parent=83 // pred_fallthru
          _
        %v756 = vld [vmem:[%s620] sm:$0xff]
        %v757 = vpack.c.bf16 %v756, %v756
        %v758 = vld [vmem:[%s2] sm:$0xf]
        %v759 = vld [vmem:[%s2 + $0x4] sm:$0xf]
        %v760 = vld [vmem:[%s2 + $0x8] sm:$0xf]
        %v761 = vld [vmem:[%s2 + $0xc] sm:$0xf]
        %v762 = vld [vmem:[%s3] sm:$0x1]
        %v764 = vlaneseq
        %v765 = vshrl.u32 %v764, 7
        %v766 = vsub.s32 0, %v765
        %v767 = vrot.slane %v762, %v766
        %v773 = vunpack.c.l.b16 %v758
        %v774 = vunpack.c.l.b16 %v759
        %v775 = vunpack.c.l.b16 %v760
        %v776 = vunpack.c.l.b16 %v761
        %v777 = vpack.c.b16 %v774, %v773
        %v778 = vpack.c.b16 %v776, %v775
        %vm781 = vcmask 261120
        %v783 = vsel %vm781, %v757, 0
        %785 = vmatprep.subr.bf16.mxu0 0
        %786 = vmatpush1.bf16.msra.mxu0 0
        %787 = vmatprep.subr.bf16.mxu0 0
        %788 = vmatpush1.bf16.msra.mxu0 0
        %789 = vmatprep.subr.bf16.mxu0 0
        %790 = vmatpush1.bf16.msra.mxu0 0
        %791 = vmatprep.subr.bf16.mxu0 0
        %792 = vmatpush1.bf16.msra.mxu0 0
        %793 = vmatprep.subr.bf16.mxu0 0
        %794 = vmatpush1.bf16.msra.mxu0 0
        %795 = vmatprep.subr.bf16.mxu0 0
        %796 = vmatpush1.bf16.msra.mxu0 0
        %797 = vmatprep.subr.bf16.mxu0 0
        %798 = vmatpush1.bf16.msra.mxu0 %v778
        %799 = vmatprep.subr.bf16.mxu0 0
        %800 = vmatpush1.bf16.msra.mxu0 %v777
        %801 = vmatprep.subr.bf16.mxu0 0
        %802 = vmatpush2.bf16.msra.mxu0 0
        %803 = vmatprep.subr.bf16.mxu0 0
        %804 = vmatpush2.bf16.msra.mxu0 0
        %805 = vmatprep.subr.bf16.mxu0 0
        %806 = vmatpush2.bf16.msra.mxu0 0
        %807 = vmatprep.subr.bf16.mxu0 0
        %808 = vmatpush2.bf16.msra.mxu0 0
        %809 = vmatprep.subr.bf16.mxu0 0
        %810 = vmatpush2.bf16.msra.mxu0 0
        %811 = vmatprep.subr.bf16.mxu0 0
        %812 = vmatpush2.bf16.msra.mxu0 0
        %813 = vmatprep.subr.bf16.mxu0 0
        %814 = vmatpush2.bf16.msra.mxu0 0
        %815 = vmatprep.subr.bf16.mxu0 0
        %816 = vmatpush2.bf16.msra.mxu0 0
        %817 = vmatprep.mubr.bf16.mxu0 0
        %818 = vmatmul.mubr.bf16.gmra.mxu0 %v783
        %v819 = vpop.f32.mrf.mxu0
        %v820 = vadd.f32 %v767, %v819
        %v821 = vpop.f32.mrf.mxu0
        %v822 = vpop.f32.mrf.mxu0
        %v823 = vpop.f32.mrf.mxu0
        %824 = vdwg.mxu0
        %v825 = vmul.f32 %v820, 0.35355338
        %v826 = vpack.c.bf16 %v825, %v825
        %v827 = vld [vmem:[#allocation2] sm:$0xf]
        %vm828 = vcmask 64512
        %v830 = vsel %vm828, %v826, 0
        %vm832 = vcmask 1043456
        %v834 = vsel %vm832, %v827, 0
        %836 = vmatprep.subr.bf16.mxu0 0
        %837 = vmatpush1.bf16.msra.mxu0 0
        %838 = vmatprep.subr.bf16.mxu0 0
        %839 = vmatpush1.bf16.msra.mxu0 0
        %840 = vmatprep.subr.bf16.mxu0 0
        %841 = vmatpush1.bf16.msra.mxu0 0
        %842 = vmatprep.subr.bf16.mxu0 0
        %843 = vmatpush1.bf16.msra.mxu0 0
        %844 = vmatprep.subr.bf16.mxu0 0
        %845 = vmatpush1.bf16.msra.mxu0 0
        %846 = vmatprep.subr.bf16.mxu0 0
        %847 = vmatpush1.bf16.msra.mxu0 0
        %848 = vmatprep.subr.bf16.mxu0 0
        %849 = vmatpush1.bf16.msra.mxu0 0
        %850 = vmatprep.subr.bf16.mxu0 0
        %851 = vmatpush1.bf16.msra.mxu0 %v834
        %852 = vmatprep.subr.bf16.mxu0 0
        %853 = vmatpush2.bf16.msra.mxu0 0
        %854 = vmatprep.subr.bf16.mxu0 0
        %855 = vmatpush2.bf16.msra.mxu0 0
        %856 = vmatprep.subr.bf16.mxu0 0
        %857 = vmatpush2.bf16.msra.mxu0 0
        %858 = vmatprep.subr.bf16.mxu0 0
        %859 = vmatpush2.bf16.msra.mxu0 0
        %860 = vmatprep.subr.bf16.mxu0 0
        %861 = vmatpush2.bf16.msra.mxu0 0
        %862 = vmatprep.subr.bf16.mxu0 0
        %863 = vmatpush2.bf16.msra.mxu0 0
        %864 = vmatprep.subr.bf16.mxu0 0
        %865 = vmatpush2.bf16.msra.mxu0 0
        %866 = vmatprep.subr.bf16.mxu0 0
        %867 = vmatpush2.bf16.msra.mxu0 0
        %868 = vmatprep.mubr.bf16.mxu0 0
        %869 = vmatmul.mubr.bf16.gmra.mxu0 %v830
        %v870 = vpop.f32.mrf.mxu0
        %v871 = vadd.f32 0.0, %v870
        %v872 = vpop.f32.mrf.mxu0
        %v873 = vpop.f32.mrf.mxu0
        %v874 = vpop.f32.mrf.mxu0
        %875 = vdwg.mxu0
        %v876 = vsel %vm828, %v871, -inf
        %877 = vmax.xlane.f32.xlu0 %v876
        %v878 = vpop.xlane.xlu0 %877
        %v879 = vsub.f32 %v871, %v878
        %v880 = vmul.f32 %v879, 1.442695
        %v881 = vpow.pop %v880
        %v882 = vsel %vm828, %v881, 0.0
        %883 = vadd.xlane.f32.xlu0 %v882
        %v884 = vpop.xlane.xlu0 %883
        %v885 = vrcp.pop %v884
        %v886 = vmul.f32 %v881, %v885
        %v887 = vpack.c.bf16 %v886, %v886
        %v888 = vld [vmem:[#allocation3] sm:$0xf]
        %v890 = vsel %vm828, %v887, 0
        %v893 = vsel %vm832, %v888, 0
        %895 = vmatprep.subr.bf16.mxu0 0
        %896 = vmatpush1.bf16.msra.mxu0 0
        %897 = vmatprep.subr.bf16.mxu0 0
        %898 = vmatpush1.bf16.msra.mxu0 0
        %899 = vmatprep.subr.bf16.mxu0 0
        %900 = vmatpush1.bf16.msra.mxu0 0
        %901 = vmatprep.subr.bf16.mxu0 0
        %902 = vmatpush1.bf16.msra.mxu0 0
        %903 = vmatprep.subr.bf16.mxu0 0
        %904 = vmatpush1.bf16.msra.mxu0 0
        %905 = vmatprep.subr.bf16.mxu0 0
        %906 = vmatpush1.bf16.msra.mxu0 0
        %907 = vmatprep.subr.bf16.mxu0 0
        %908 = vmatpush1.bf16.msra.mxu0 0
        %909 = vmatprep.subr.bf16.mxu0 0
        %910 = vmatpush1.bf16.msra.mxu0 %v893
        %911 = vmatprep.subr.bf16.mxu0 0
        %912 = vmatpush2.bf16.msra.mxu0 0
        %913 = vmatprep.subr.bf16.mxu0 0
        %914 = vmatpush2.bf16.msra.mxu0 0
        %915 = vmatprep.subr.bf16.mxu0 0
        %916 = vmatpush2.bf16.msra.mxu0 0
        %917 = vmatprep.subr.bf16.mxu0 0
        %918 = vmatpush2.bf16.msra.mxu0 0
        %919 = vmatprep.subr.bf16.mxu0 0
        %920 = vmatpush2.bf16.msra.mxu0 0
        %921 = vmatprep.subr.bf16.mxu0 0
        %922 = vmatpush2.bf16.msra.mxu0 0
        %923 = vmatprep.subr.bf16.mxu0 0
        %924 = vmatpush2.bf16.msra.mxu0 0
        %925 = vmatprep.subr.bf16.mxu0 0
        %926 = vmatpush2.bf16.msra.mxu0 0
        %927 = vmatprep.mubr.bf16.mxu0 0
        %928 = vmatmul.mubr.bf16.gmra.mxu0 %v890
        %v929 = vpop.f32.mrf.mxu0
        %v930 = vadd.f32 0.0, %v929
        %v931 = vpop.f32.mrf.mxu0
        %v932 = vpop.f32.mrf.mxu0
        %v933 = vpop.f32.mrf.mxu0
        %934 = vdwg.mxu0
        %v935 = vpack.c.bf16 %v930, %v930
        %vm936 = vcmask 60416
        %937 = vst.msk [vmem:[#allocation4] sm:$0xf] %vm936, %v935
        %v938 = vld [vmem:[#allocation2 + $0x4] sm:$0xf]
        %940 = vrot.lane.b32.xlu0 %v826, 120
        %v941 = vpop.permute.xlu0 %940
        %v943 = vsel %vm828, %v941, 0
        %v946 = vsel %vm832, %v938, 0
        %948 = vmatprep.subr.bf16.mxu0 0
        %949 = vmatpush1.bf16.msra.mxu0 0
        %950 = vmatprep.subr.bf16.mxu0 0
        %951 = vmatpush1.bf16.msra.mxu0 0
        %952 = vmatprep.subr.bf16.mxu0 0
        %953 = vmatpush1.bf16.msra.mxu0 0
        %954 = vmatprep.subr.bf16.mxu0 0
        %955 = vmatpush1.bf16.msra.mxu0 0
        %956 = vmatprep.subr.bf16.mxu0 0
        %957 = vmatpush1.bf16.msra.mxu0 0
        %958 = vmatprep.subr.bf16.mxu0 0
        %959 = vmatpush1.bf16.msra.mxu0 0
        %960 = vmatprep.subr.bf16.mxu0 0
        %961 = vmatpush1.bf16.msra.mxu0 0
        %962 = vmatprep.subr.bf16.mxu0 0
        %963 = vmatpush1.bf16.msra.mxu0 %v946
        %964 = vmatprep.subr.bf16.mxu0 0
        %965 = vmatpush2.bf16.msra.mxu0 0
        %966 = vmatprep.subr.bf16.mxu0 0
        %967 = vmatpush2.bf16.msra.mxu0 0
        %968 = vmatprep.subr.bf16.mxu0 0
        %969 = vmatpush2.bf16.msra.mxu0 0
        %970 = vmatprep.subr.bf16.mxu0 0
        %971 = vmatpush2.bf16.msra.mxu0 0
        %972 = vmatprep.subr.bf16.mxu0 0
        %973 = vmatpush2.bf16.msra.mxu0 0
        %974 = vmatprep.subr.bf16.mxu0 0
        %975 = vmatpush2.bf16.msra.mxu0 0
        %976 = vmatprep.subr.bf16.mxu0 0
        %977 = vmatpush2.bf16.msra.mxu0 0
        %978 = vmatprep.subr.bf16.mxu0 0
        %979 = vmatpush2.bf16.msra.mxu0 0
        %980 = vmatprep.mubr.bf16.mxu0 0
        %981 = vmatmul.mubr.bf16.gmra.mxu0 %v943
        %v982 = vpop.f32.mrf.mxu0
        %v983 = vadd.f32 0.0, %v982
        %v984 = vpop.f32.mrf.mxu0
        %v985 = vpop.f32.mrf.mxu0
        %v986 = vpop.f32.mrf.mxu0
        %987 = vdwg.mxu0
        %v988 = vsel %vm828, %v983, -inf
        %989 = vmax.xlane.f32.xlu0 %v988
        %v990 = vpop.xlane.xlu0 %989
        %v991 = vsub.f32 %v983, %v990
        %v992 = vmul.f32 %v991, 1.442695
        %v993 = vpow.pop %v992
        %v994 = vsel %vm828, %v993, 0.0
        %995 = vadd.xlane.f32.xlu0 %v994
        %v996 = vpop.xlane.xlu0 %995
        %v997 = vrcp.pop %v996
        %v998 = vmul.f32 %v993, %v997
        %v999 = vpack.c.bf16 %v998, %v998
        %v1000 = vld [vmem:[#allocation3] sm:$0xf]
        %v1002 = vunpack.c.l.b16 %v1000
        %v1003 = vpack.c.b16 %v1002, %v1002
        %1004 = vrot.lane.b32.xlu0 %v1003, 120
        %v1005 = vpop.permute.xlu0 %1004
        %v1007 = vsel %vm828, %v999, 0
        %v1010 = vsel %vm832, %v1005, 0
        %1012 = vmatprep.subr.bf16.mxu0 0
        %1013 = vmatpush1.bf16.msra.mxu0 0
        %1014 = vmatprep.subr.bf16.mxu0 0
        %1015 = vmatpush1.bf16.msra.mxu0 0
        %1016 = vmatprep.subr.bf16.mxu0 0
        %1017 = vmatpush1.bf16.msra.mxu0 0
        %1018 = vmatprep.subr.bf16.mxu0 0
        %1019 = vmatpush1.bf16.msra.mxu0 0
        %1020 = vmatprep.subr.bf16.mxu0 0
        %1021 = vmatpush1.bf16.msra.mxu0 0
        %1022 = vmatprep.subr.bf16.mxu0 0
        %1023 = vmatpush1.bf16.msra.mxu0 0
        %1024 = vmatprep.subr.bf16.mxu0 0
        %1025 = vmatpush1.bf16.msra.mxu0 0
        %1026 = vmatprep.subr.bf16.mxu0 0
        %1027 = vmatpush1.bf16.msra.mxu0 %v1010
        %1028 = vmatprep.subr.bf16.mxu0 0
        %1029 = vmatpush2.bf16.msra.mxu0 0
        %1030 = vmatprep.subr.bf16.mxu0 0
        %1031 = vmatpush2.bf16.msra.mxu0 0
        %1032 = vmatprep.subr.bf16.mxu0 0
        %1033 = vmatpush2.bf16.msra.mxu0 0
        %1034 = vmatprep.subr.bf16.mxu0 0
        %1035 = vmatpush2.bf16.msra.mxu0 0
        %1036 = vmatprep.subr.bf16.mxu0 0
        %1037 = vmatpush2.bf16.msra.mxu0 0
        %1038 = vmatprep.subr.bf16.mxu0 0
        %1039 = vmatpush2.bf16.msra.mxu0 0
        %1040 = vmatprep.subr.bf16.mxu0 0
        %1041 = vmatpush2.bf16.msra.mxu0 0
        %1042 = vmatprep.subr.bf16.mxu0 0
        %1043 = vmatpush2.bf16.msra.mxu0 0
        %1044 = vmatprep.mubr.bf16.mxu0 0
        %1045 = vmatmul.mubr.bf16.gmra.mxu0 %v1007
        %v1046 = vpop.f32.mrf.mxu0
        %v1047 = vadd.f32 0.0, %v1046
        %v1048 = vpop.f32.mrf.mxu0
        %v1049 = vpop.f32.mrf.mxu0
        %v1050 = vpop.f32.mrf.mxu0
        %1051 = vdwg.mxu0
        %v1052 = vpack.c.bf16 %v1047, %v1047
        %v1054 = vunpack.c.l.b16 %v1052
        %v1055 = vpack.c.b16 %v1054, %v1054
        %1056 = vrot.lane.b32.xlu0 %v1055, 8
        %v1057 = vpop.permute.xlu0 %1056
        %vm1059 = vcmask 126016
        %1060 = vst.msk [vmem:[#allocation4] sm:$0xf] %vm1059, %v1057
        %v1061 = vld [vmem:[#allocation2 + $0x8] sm:$0xf]
        %1062 = vrot.lane.b32.xlu0 %v826, 112
        %v1063 = vpop.permute.xlu0 %1062
        %v1065 = vsel %vm828, %v1063, 0
        %v1068 = vsel %vm832, %v1061, 0
        %1070 = vmatprep.subr.bf16.mxu0 0
        %1071 = vmatpush1.bf16.msra.mxu0 0
        %1072 = vmatprep.subr.bf16.mxu0 0
        %1073 = vmatpush1.bf16.msra.mxu0 0
        %1074 = vmatprep.subr.bf16.mxu0 0
        %1075 = vmatpush1.bf16.msra.mxu0 0
        %1076 = vmatprep.subr.bf16.mxu0 0
        %1077 = vmatpush1.bf16.msra.mxu0 0
        %1078 = vmatprep.subr.bf16.mxu0 0
        %1079 = vmatpush1.bf16.msra.mxu0 0
        %1080 = vmatprep.subr.bf16.mxu0 0
        %1081 = vmatpush1.bf16.msra.mxu0 0
        %1082 = vmatprep.subr.bf16.mxu0 0
        %1083 = vmatpush1.bf16.msra.mxu0 0
        %1084 = vmatprep.subr.bf16.mxu0 0
        %1085 = vmatpush1.bf16.msra.mxu0 %v1068
        %1086 = vmatprep.subr.bf16.mxu0 0
        %1087 = vmatpush2.bf16.msra.mxu0 0
        %1088 = vmatprep.subr.bf16.mxu0 0
        %1089 = vmatpush2.bf16.msra.mxu0 0
        %1090 = vmatprep.subr.bf16.mxu0 0
        %1091 = vmatpush2.bf16.msra.mxu0 0
        %1092 = vmatprep.subr.bf16.mxu0 0
        %1093 = vmatpush2.bf16.msra.mxu0 0
        %1094 = vmatprep.subr.bf16.mxu0 0
        %1095 = vmatpush2.bf16.msra.mxu0 0
        %1096 = vmatprep.subr.bf16.mxu0 0
        %1097 = vmatpush2.bf16.msra.mxu0 0
        %1098 = vmatprep.subr.bf16.mxu0 0
        %1099 = vmatpush2.bf16.msra.mxu0 0
        %1100 = vmatprep.subr.bf16.mxu0 0
        %1101 = vmatpush2.bf16.msra.mxu0 0
        %1102 = vmatprep.mubr.bf16.mxu0 0
        %1103 = vmatmul.mubr.bf16.gmra.mxu0 %v1065
        %v1104 = vpop.f32.mrf.mxu0
        %v1105 = vadd.f32 0.0, %v1104
        %v1106 = vpop.f32.mrf.mxu0
        %v1107 = vpop.f32.mrf.mxu0
        %v1108 = vpop.f32.mrf.mxu0
        %1109 = vdwg.mxu0
        %v1110 = vsel %vm828, %v1105, -inf
        %1111 = vmax.xlane.f32.xlu0 %v1110
        %v1112 = vpop.xlane.xlu0 %1111
        %v1113 = vsub.f32 %v1105, %v1112
        %v1114 = vmul.f32 %v1113, 1.442695
        %v1115 = vpow.pop %v1114
        %v1116 = vsel %vm828, %v1115, 0.0
        %1117 = vadd.xlane.f32.xlu0 %v1116
        %v1118 = vpop.xlane.xlu0 %1117
        %v1119 = vrcp.pop %v1118
        %v1120 = vmul.f32 %v1115, %v1119
        %v1121 = vpack.c.bf16 %v1120, %v1120
        %v1122 = vld [vmem:[#allocation3] sm:$0xf]
        %v1124 = vunpack.c.l.b16 %v1122
        %v1125 = vpack.c.b16 %v1124, %v1124
        %1126 = vrot.lane.b32.xlu0 %v1125, 112
        %v1127 = vpop.permute.xlu0 %1126
        %v1129 = vsel %vm828, %v1121, 0
        %v1132 = vsel %vm832, %v1127, 0
        %1134 = vmatprep.subr.bf16.mxu0 0
        %1135 = vmatpush1.bf16.msra.mxu0 0
        %1136 = vmatprep.subr.bf16.mxu0 0
        %1137 = vmatpush1.bf16.msra.mxu0 0
        %1138 = vmatprep.subr.bf16.mxu0 0
        %1139 = vmatpush1.bf16.msra.mxu0 0
        %1140 = vmatprep.subr.bf16.mxu0 0
        %1141 = vmatpush1.bf16.msra.mxu0 0
        %1142 = vmatprep.subr.bf16.mxu0 0
        %1143 = vmatpush1.bf16.msra.mxu0 0
        %1144 = vmatprep.subr.bf16.mxu0 0
        %1145 = vmatpush1.bf16.msra.mxu0 0
        %1146 = vmatprep.subr.bf16.mxu0 0
        %1147 = vmatpush1.bf16.msra.mxu0 0
        %1148 = vmatprep.subr.bf16.mxu0 0
        %1149 = vmatpush1.bf16.msra.mxu0 %v1132
        %1150 = vmatprep.subr.bf16.mxu0 0
        %1151 = vmatpush2.bf16.msra.mxu0 0
        %1152 = vmatprep.subr.bf16.mxu0 0
        %1153 = vmatpush2.bf16.msra.mxu0 0
        %1154 = vmatprep.subr.bf16.mxu0 0
        %1155 = vmatpush2.bf16.msra.mxu0 0
        %1156 = vmatprep.subr.bf16.mxu0 0
        %1157 = vmatpush2.bf16.msra.mxu0 0
        %1158 = vmatprep.subr.bf16.mxu0 0
        %1159 = vmatpush2.bf16.msra.mxu0 0
        %1160 = vmatprep.subr.bf16.mxu0 0
        %1161 = vmatpush2.bf16.msra.mxu0 0
        %1162 = vmatprep.subr.bf16.mxu0 0
        %1163 = vmatpush2.bf16.msra.mxu0 0
        %1164 = vmatprep.subr.bf16.mxu0 0
        %1165 = vmatpush2.bf16.msra.mxu0 0
        %1166 = vmatprep.mubr.bf16.mxu0 0
        %1167 = vmatmul.mubr.bf16.gmra.mxu0 %v1129
        %v1168 = vpop.f32.mrf.mxu0
        %v1169 = vadd.f32 0.0, %v1168
        %v1170 = vpop.f32.mrf.mxu0
        %v1171 = vpop.f32.mrf.mxu0
        %v1172 = vpop.f32.mrf.mxu0
        %1173 = vdwg.mxu0
        %v1174 = vpack.c.bf16 %v1169, %v1169
        %v1176 = vunpack.c.l.b16 %v1174
        %v1177 = vpack.c.b16 %v1176, %v1176
        %1178 = vrot.lane.b32.xlu0 %v1177, 16
        %v1179 = vpop.permute.xlu0 %1178
        %vm1181 = vcmask 191616
        %1182 = vst.msk [vmem:[#allocation4] sm:$0xf] %vm1181, %v1179
        %v1183 = vld [vmem:[#allocation2 + $0xc] sm:$0xf]
        %1184 = vrot.lane.b32.xlu0 %v826, 104
        %v1185 = vpop.permute.xlu0 %1184
        %v1187 = vsel %vm828, %v1185, 0
        %v1190 = vsel %vm832, %v1183, 0
        %1192 = vmatprep.subr.bf16.mxu0 0
        %1193 = vmatpush1.bf16.msra.mxu0 0
        %1194 = vmatprep.subr.bf16.mxu0 0
        %1195 = vmatpush1.bf16.msra.mxu0 0
        %1196 = vmatprep.subr.bf16.mxu0 0
        %1197 = vmatpush1.bf16.msra.mxu0 0
        %1198 = vmatprep.subr.bf16.mxu0 0
        %1199 = vmatpush1.bf16.msra.mxu0 0
        %1200 = vmatprep.subr.bf16.mxu0 0
        %1201 = vmatpush1.bf16.msra.mxu0 0
        %1202 = vmatprep.subr.bf16.mxu0 0
        %1203 = vmatpush1.bf16.msra.mxu0 0
        %1204 = vmatprep.subr.bf16.mxu0 0
        %1205 = vmatpush1.bf16.msra.mxu0 0
        %1206 = vmatprep.subr.bf16.mxu0 0
        %1207 = vmatpush1.bf16.msra.mxu0 %v1190
        %1208 = vmatprep.subr.bf16.mxu0 0
        %1209 = vmatpush2.bf16.msra.mxu0 0
        %1210 = vmatprep.subr.bf16.mxu0 0
        %1211 = vmatpush2.bf16.msra.mxu0 0
        %1212 = vmatprep.subr.bf16.mxu0 0
        %1213 = vmatpush2.bf16.msra.mxu0 0
        %1214 = vmatprep.subr.bf16.mxu0 0
        %1215 = vmatpush2.bf16.msra.mxu0 0
        %1216 = vmatprep.subr.bf16.mxu0 0
        %1217 = vmatpush2.bf16.msra.mxu0 0
        %1218 = vmatprep.subr.bf16.mxu0 0
        %1219 = vmatpush2.bf16.msra.mxu0 0
        %1220 = vmatprep.subr.bf16.mxu0 0
        %1221 = vmatpush2.bf16.msra.mxu0 0
        %1222 = vmatprep.subr.bf16.mxu0 0
        %1223 = vmatpush2.bf16.msra.mxu0 0
        %1224 = vmatprep.mubr.bf16.mxu0 0
        %1225 = vmatmul.mubr.bf16.gmra.mxu0 %v1187
        %v1226 = vpop.f32.mrf.mxu0
        %v1227 = vadd.f32 0.0, %v1226
        %v1228 = vpop.f32.mrf.mxu0
        %v1229 = vpop.f32.mrf.mxu0
        %v1230 = vpop.f32.mrf.mxu0
        %1231 = vdwg.mxu0
        %v1232 = vsel %vm828, %v1227, -inf
        %1233 = vmax.xlane.f32.xlu0 %v1232
        %v1234 = vpop.xlane.xlu0 %1233
        %v1235 = vsub.f32 %v1227, %v1234
        %v1236 = vmul.f32 %v1235, 1.442695
        %v1237 = vpow.pop %v1236
        %v1238 = vsel %vm828, %v1237, 0.0
        %1239 = vadd.xlane.f32.xlu0 %v1238
        %v1240 = vpop.xlane.xlu0 %1239
        %v1241 = vrcp.pop %v1240
        %v1242 = vmul.f32 %v1237, %v1241
        %v1243 = vpack.c.bf16 %v1242, %v1242
        %v1244 = vld [vmem:[#allocation3] sm:$0xf]
        %v1246 = vunpack.c.l.b16 %v1244
        %v1247 = vpack.c.b16 %v1246, %v1246
        %1248 = vrot.lane.b32.xlu0 %v1247, 104
        %v1249 = vpop.permute.xlu0 %1248
        %v1251 = vsel %vm828, %v1243, 0
        %v1254 = vsel %vm832, %v1249, 0
        %1256 = vmatprep.subr.bf16.mxu0 0
        %1257 = vmatpush1.bf16.msra.mxu0 0
        %1258 = vmatprep.subr.bf16.mxu0 0
        %1259 = vmatpush1.bf16.msra.mxu0 0
        %1260 = vmatprep.subr.bf16.mxu0 0
        %1261 = vmatpush1.bf16.msra.mxu0 0
        %1262 = vmatprep.subr.bf16.mxu0 0
        %1263 = vmatpush1.bf16.msra.mxu0 0
        %1264 = vmatprep.subr.bf16.mxu0 0
        %1265 = vmatpush1.bf16.msra.mxu0 0
        %1266 = vmatprep.subr.bf16.mxu0 0
        %1267 = vmatpush1.bf16.msra.mxu0 0
        %1268 = vmatprep.subr.bf16.mxu0 0
        %1269 = vmatpush1.bf16.msra.mxu0 0
        %1270 = vmatprep.subr.bf16.mxu0 0
        %1271 = vmatpush1.bf16.msra.mxu0 %v1254
        %1272 = vmatprep.subr.bf16.mxu0 0
        %1273 = vmatpush2.bf16.msra.mxu0 0
        %1274 = vmatprep.subr.bf16.mxu0 0
        %1275 = vmatpush2.bf16.msra.mxu0 0
        %1276 = vmatprep.subr.bf16.mxu0 0
        %1277 = vmatpush2.bf16.msra.mxu0 0
        %1278 = vmatprep.subr.bf16.mxu0 0
        %1279 = vmatpush2.bf16.msra.mxu0 0
        %1280 = vmatprep.subr.bf16.mxu0 0
        %1281 = vmatpush2.bf16.msra.mxu0 0
        %1282 = vmatprep.subr.bf16.mxu0 0
        %1283 = vmatpush2.bf16.msra.mxu0 0
        %1284 = vmatprep.subr.bf16.mxu0 0
        %1285 = vmatpush2.bf16.msra.mxu0 0
        %1286 = vmatprep.subr.bf16.mxu0 0
        %1287 = vmatpush2.bf16.msra.mxu0 0
        %1288 = vmatprep.mubr.bf16.mxu0 0
        %1289 = vmatmul.mubr.bf16.gmra.mxu0 %v1251
        %v1290 = vpop.f32.mrf.mxu0
        %v1291 = vadd.f32 0.0, %v1290
        %v1292 = vpop.f32.mrf.mxu0
        %v1293 = vpop.f32.mrf.mxu0
        %v1294 = vpop.f32.mrf.mxu0
        %1295 = vdwg.mxu0
        %v1296 = vpack.c.bf16 %v1291, %v1291
        %v1298 = vunpack.c.l.b16 %v1296
        %v1299 = vpack.c.b16 %v1298, %v1298
        %1300 = vrot.lane.b32.xlu0 %v1299, 24
        %v1301 = vpop.permute.xlu0 %1300
        %vm1303 = vcmask 257216
        %1304 = vst.msk [vmem:[#allocation4] sm:$0xf] %vm1303, %v1301
        %v1305 = vld [vmem:[#allocation4] sm:$0xf]
        %v1306 = vld [vmem:[#allocation8] sm:$0xf]
        %v1307 = vld [vmem:[#allocation8 + $0x4] sm:$0xf]
        %v1308 = vld [vmem:[#allocation8 + $0x8] sm:$0xf]
        %v1309 = vld [vmem:[#allocation8 + $0xc] sm:$0xf]
        %v1310 = vld [vmem:[%s7] sm:$0x1]
        %v1312 = vlaneseq
        %v1313 = vshrl.u32 %v1312, 7
        %v1314 = vsub.s32 0, %v1313
        %v1315 = vrot.slane %v1310, %v1314
        %v1321 = vunpack.c.l.b16 %v1306
        %v1322 = vunpack.c.l.b16 %v1307
        %v1323 = vunpack.c.l.b16 %v1308
        %v1324 = vunpack.c.l.b16 %v1309
        %v1325 = vpack.c.b16 %v1322, %v1321
        %v1326 = vpack.c.b16 %v1324, %v1323
        %v1330 = vsel %vm781, %v1305, 0
        %1332 = vmatprep.subr.bf16.mxu0 0
        %1333 = vmatpush1.bf16.msra.mxu0 0
        %1334 = vmatprep.subr.bf16.mxu0 0
        %1335 = vmatpush1.bf16.msra.mxu0 0
        %1336 = vmatprep.subr.bf16.mxu0 0
        %1337 = vmatpush1.bf16.msra.mxu0 0
        %1338 = vmatprep.subr.bf16.mxu0 0
        %1339 = vmatpush1.bf16.msra.mxu0 0
        %1340 = vmatprep.subr.bf16.mxu0 0
        %1341 = vmatpush1.bf16.msra.mxu0 0
        %1342 = vmatprep.subr.bf16.mxu0 0
        %1343 = vmatpush1.bf16.msra.mxu0 0
        %1344 = vmatprep.subr.bf16.mxu0 0
        %1345 = vmatpush1.bf16.msra.mxu0 %v1326
        %1346 = vmatprep.subr.bf16.mxu0 0
        %1347 = vmatpush1.bf16.msra.mxu0 %v1325
        %1348 = vmatprep.subr.bf16.mxu0 0
        %1349 = vmatpush2.bf16.msra.mxu0 0
        %1350 = vmatprep.subr.bf16.mxu0 0
        %1351 = vmatpush2.bf16.msra.mxu0 0
        %1352 = vmatprep.subr.bf16.mxu0 0
        %1353 = vmatpush2.bf16.msra.mxu0 0
        %1354 = vmatprep.subr.bf16.mxu0 0
        %1355 = vmatpush2.bf16.msra.mxu0 0
        %1356 = vmatprep.subr.bf16.mxu0 0
        %1357 = vmatpush2.bf16.msra.mxu0 0
        %1358 = vmatprep.subr.bf16.mxu0 0
        %1359 = vmatpush2.bf16.msra.mxu0 0
        %1360 = vmatprep.subr.bf16.mxu0 0
        %1361 = vmatpush2.bf16.msra.mxu0 0
        %1362 = vmatprep.subr.bf16.mxu0 0
        %1363 = vmatpush2.bf16.msra.mxu0 0
        %1364 = vmatprep.mubr.bf16.mxu0 0
        %1365 = vmatmul.mubr.bf16.gmra.mxu0 %v1330
        %v1366 = vpop.f32.mrf.mxu0
        %v1367 = vadd.f32 %v1315, %v1366
        %v1368 = vpop.f32.mrf.mxu0
        %v1369 = vpop.f32.mrf.mxu0
        %v1370 = vpop.f32.mrf.mxu0
        %1371 = vdwg.mxu0
        %v1372 = vadd.f32 %v756, %v1367
        %v1373 = vld [vmem:[%s8] sm:$0x1]
        %v1374 = vld [vmem:[%s9] sm:$0x1]
        %v1375 = vsel %vm781, %v1372, 0.0
        %1376 = vadd.xlane.f32.xlu0 %v1375
        %v1377 = vpop.xlane.xlu0 %1376
        %v1378 = vrcp.pop 32.0
        %v1379 = vmul.f32 %v1377, %v1378
        %v1380 = vsub.f32 %v1372, %v1379
        %v1381 = vmul.f32 %v1380, %v1380
        %v1382 = vsel %vm781, %v1381, 0.0
        %1383 = vadd.xlane.f32.xlu0 %v1382
        %v1384 = vpop.xlane.xlu0 %1383
        %v1385 = vmul.f32 %v1384, %v1378
        %v1386 = vadd.f32 %v1385, 1e-05
        %v1387 = vrsqrt.pop %v1386
        %v1388 = vmul.f32 %v1380, %v1387
        %v1390 = vlaneseq
        %v1391 = vshrl.u32 %v1390, 7
        %v1392 = vsub.s32 0, %v1391
        %v1393 = vrot.slane %v1373, %v1392
        %v1395 = vmul.f32 %v1388, %v1393
        %v1397 = vlaneseq
        %v1398 = vshrl.u32 %v1397, 7
        %v1399 = vsub.s32 0, %v1398
        %v1400 = vrot.slane %v1374, %v1399
        %v1402 = vadd.f32 %v1395, %v1400
        %v1403 = vpack.c.bf16 %v1402, %v1402
        %v1404 = vld [vmem:[#allocation10] sm:$0xf]
        %v1405 = vld [vmem:[#allocation10 + $0x4] sm:$0xf]
        %v1406 = vld [vmem:[#allocation10 + $0x8] sm:$0xf]
        %v1407 = vld [vmem:[#allocation10 + $0xc] sm:$0xf]
        %v1408 = vld [vmem:[#allocation11] sm:$0x1]
        %v1410 = vlaneseq
        %v1411 = vshrl.u32 %v1410, 7
        %v1412 = vsub.s32 0, %v1411
        %v1413 = vrot.slane %v1408, %v1412
        %v1419 = vunpack.c.l.b16 %v1404
        %v1420 = vunpack.c.l.b16 %v1405
        %v1421 = vunpack.c.l.b16 %v1406
        %v1422 = vunpack.c.l.b16 %v1407
        %v1423 = vpack.c.b16 %v1420, %v1419
        %v1424 = vpack.c.b16 %v1422, %v1421
        %v1428 = vsel %vm781, %v1403, 0
        %1430 = vmatprep.subr.bf16.mxu0 0
        %1431 = vmatpush1.bf16.msra.mxu0 0
        %1432 = vmatprep.subr.bf16.mxu0 0
        %1433 = vmatpush1.bf16.msra.mxu0 0
        %1434 = vmatprep.subr.bf16.mxu0 0
        %1435 = vmatpush1.bf16.msra.mxu0 0
        %1436 = vmatprep.subr.bf16.mxu0 0
        %1437 = vmatpush1.bf16.msra.mxu0 0
        %1438 = vmatprep.subr.bf16.mxu0 0
        %1439 = vmatpush1.bf16.msra.mxu0 0
        %1440 = vmatprep.subr.bf16.mxu0 0
        %1441 = vmatpush1.bf16.msra.mxu0 0
        %1442 = vmatprep.subr.bf16.mxu0 0
        %1443 = vmatpush1.bf16.msra.mxu0 %v1424
        %1444 = vmatprep.subr.bf16.mxu0 0
        %1445 = vmatpush1.bf16.msra.mxu0 %v1423
        %1446 = vmatprep.subr.bf16.mxu0 0
        %1447 = vmatpush2.bf16.msra.mxu0 0
        %1448 = vmatprep.subr.bf16.mxu0 0
        %1449 = vmatpush2.bf16.msra.mxu0 0
        %1450 = vmatprep.subr.bf16.mxu0 0
        %1451 = vmatpush2.bf16.msra.mxu0 0
        %1452 = vmatprep.subr.bf16.mxu0 0
        %1453 = vmatpush2.bf16.msra.mxu0 0
        %1454 = vmatprep.subr.bf16.mxu0 0
        %1455 = vmatpush2.bf16.msra.mxu0 0
        %1456 = vmatprep.subr.bf16.mxu0 0
        %1457 = vmatpush2.bf16.msra.mxu0 0
        %1458 = vmatprep.subr.bf16.mxu0 0
        %1459 = vmatpush2.bf16.msra.mxu0 0
        %1460 = vmatprep.subr.bf16.mxu0 0
        %1461 = vmatpush2.bf16.msra.mxu0 0
        %1462 = vmatprep.mubr.bf16.mxu0 0
        %1463 = vmatmul.mubr.bf16.gmra.mxu0 %v1428
        %v1464 = vpop.f32.mrf.mxu0
        %v1465 = vadd.f32 %v1413, %v1464
        %v1466 = vpop.f32.mrf.mxu0
        %v1467 = vpop.f32.mrf.mxu0
        %v1468 = vpop.f32.mrf.mxu0
        %1469 = vdwg.mxu0
        %v1470 = vmax.f32 %v1465, 0.0
        %v1471 = vpack.c.bf16 %v1470, %v1470
        %v1472 = vld [vmem:[%s12] sm:$0xf]
        %v1473 = vld [vmem:[%s12 + $0x4] sm:$0xf]
        %v1474 = vld [vmem:[%s12 + $0x8] sm:$0xf]
        %v1475 = vld [vmem:[%s12 + $0xc] sm:$0xf]
        %v1476 = vld [vmem:[%s12 + $0x10] sm:$0xf]
        %v1477 = vld [vmem:[%s12 + $0x14] sm:$0xf]
        %v1478 = vld [vmem:[%s12 + $0x18] sm:$0xf]
        %v1479 = vld [vmem:[%s12 + $0x1c] sm:$0xf]
        %v1480 = vld [vmem:[%s13] sm:$0x1]
        %v1482 = vlaneseq
        %v1483 = vshrl.u32 %v1482, 7
        %v1484 = vsub.s32 0, %v1483
        %v1485 = vrot.slane %v1480, %v1484
        %v1495 = vunpack.c.l.b16 %v1472
        %v1496 = vunpack.c.l.b16 %v1473
        %v1497 = vunpack.c.l.b16 %v1474
        %v1498 = vunpack.c.l.b16 %v1475
        %v1499 = vunpack.c.l.b16 %v1476
        %v1500 = vunpack.c.l.b16 %v1477
        %v1501 = vunpack.c.l.b16 %v1478
        %v1502 = vunpack.c.l.b16 %v1479
        %v1503 = vpack.c.b16 %v1496, %v1495
        %v1504 = vpack.c.b16 %v1498, %v1497
        %v1505 = vpack.c.b16 %v1500, %v1499
        %v1506 = vpack.c.b16 %v1502, %v1501
        %vm1511 = vcmask 523264
        %v1513 = vsel %vm1511, %v1471, 0
        %1515 = vmatprep.subr.bf16.mxu0 0
        %1516 = vmatpush1.bf16.msra.mxu0 0
        %1517 = vmatprep.subr.bf16.mxu0 0
        %1518 = vmatpush1.bf16.msra.mxu0 0
        %1519 = vmatprep.subr.bf16.mxu0 0
        %1520 = vmatpush1.bf16.msra.mxu0 0
        %1521 = vmatprep.subr.bf16.mxu0 0
        %1522 = vmatpush1.bf16.msra.mxu0 0
        %1523 = vmatprep.subr.bf16.mxu0 0
        %1524 = vmatpush1.bf16.msra.mxu0 %v1506
        %1525 = vmatprep.subr.bf16.mxu0 0
        %1526 = vmatpush1.bf16.msra.mxu0 %v1505
        %1527 = vmatprep.subr.bf16.mxu0 0
        %1528 = vmatpush1.bf16.msra.mxu0 %v1504
        %1529 = vmatprep.subr.bf16.mxu0 0
        %1530 = vmatpush1.bf16.msra.mxu0 %v1503
        %1531 = vmatprep.subr.bf16.mxu0 0
        %1532 = vmatpush2.bf16.msra.mxu0 0
        %1533 = vmatprep.subr.bf16.mxu0 0
        %1534 = vmatpush2.bf16.msra.mxu0 0
        %1535 = vmatprep.subr.bf16.mxu0 0
        %1536 = vmatpush2.bf16.msra.mxu0 0
        %1537 = vmatprep.subr.bf16.mxu0 0
        %1538 = vmatpush2.bf16.msra.mxu0 0
        %1539 = vmatprep.subr.bf16.mxu0 0
        %1540 = vmatpush2.bf16.msra.mxu0 0
        %1541 = vmatprep.subr.bf16.mxu0 0
        %1542 = vmatpush2.bf16.msra.mxu0 0
        %1543 = vmatprep.subr.bf16.mxu0 0
        %1544 = vmatpush2.bf16.msra.mxu0 0
        %1545 = vmatprep.subr.bf16.mxu0 0
        %1546 = vmatpush2.bf16.msra.mxu0 0
        %1547 = vmatprep.mubr.bf16.mxu0 0
        %1548 = vmatmul.mubr.bf16.gmra.mxu0 %v1513
        %v1549 = vpop.f32.mrf.mxu0
        %v1550 = vadd.f32 %v1485, %v1549
        %v1551 = vpop.f32.mrf.mxu0
        %v1552 = vpop.f32.mrf.mxu0
        %v1553 = vpop.f32.mrf.mxu0
        %1554 = vdwg.mxu0
        %v1555 = vadd.f32 %v1402, %v1550
        %v1556 = vld [vmem:[%s14] sm:$0x1]
        %v1557 = vld [vmem:[%s15] sm:$0x1]
        %v1558 = vsel %vm781, %v1555, 0.0
        %1559 = vadd.xlane.f32.xlu0 %v1558
        %v1560 = vpop.xlane.xlu0 %1559
        %v1561 = vmul.f32 %v1560, %v1378
        %v1562 = vsub.f32 %v1555, %v1561
        %v1563 = vmul.f32 %v1562, %v1562
        %v1564 = vsel %vm781, %v1563, 0.0
        %1565 = vadd.xlane.f32.xlu0 %v1564
        %v1566 = vpop.xlane.xlu0 %1565
        %v1567 = vmul.f32 %v1566, %v1378
        %v1568 = vadd.f32 %v1567, 1e-05
        %v1569 = vrsqrt.pop %v1568
        %v1570 = vmul.f32 %v1562, %v1569
        %v1572 = vlaneseq
        %v1573 = vshrl.u32 %v1572, 7
        %v1574 = vsub.s32 0, %v1573
        %v1575 = vrot.slane %v1556, %v1574
        %v1577 = vmul.f32 %v1570, %v1575
        %v1579 = vlaneseq
        %v1580 = vshrl.u32 %v1579, 7
        %v1581 = vsub.s32 0, %v1580
        %v1582 = vrot.slane %v1557, %v1581
        %v1584 = vadd.f32 %v1577, %v1582
        %1585 = vst.msk [vmem:[%s613] sm:$0xff] %vm781, %v1584
        %s1586 = sand.u32 %s405, 1
        %s1587 = scalar_lea.sflag [#allocation7], %s1586
        %s1588 = sand.u32 %s405, 1
        %s1589 = smul.addr %s1588, 8
        %s1590 = scalar_lea.vmem [#allocation13], %s1589
        // Predicated region
        $region105: #{tpu_custom_call.1} parent=83 // pred_check
          %p1591 = pneg %p415
        $region106: #{tpu_custom_call.1} parent=83 // pred_check_branch
          %1593 = sbr.rel (%p1591) target = $region108
        $region107: #{tpu_custom_call.1} parent=83 // pred_region
          %s1595 = ssub.s32 128, 128
          %1596 = vsyncadd %s1587, %s1595
          %s1597 = sadd.s32 %s40, %s39
          %s1598 = smul.addr %s1597, 128
          %s1599 = scalar_lea.hbm %s16, %s1598
          %s1601 = sshll.u32 %s1590, 4
          %s1602 = int_to_ptr.vmem [resolvable:$true] %s1601
          %1604 = dma.vmem_to_hbm [thread:$0]  %s1602, 128, %s1599, %s1587
        $region108: #{tpu_custom_call.1} parent=83 // pred_fallthru
          _
      $region84: #{tpu_custom_call.1} parent=5 // pred_fallthru
        _
      %p1605 = scmp.le.s32.totalorder 2, %s30
      // Predicated region
      $region109: #{tpu_custom_call.1} parent=5 // pred_check
        %p1606 = pneg %p1605
      $region110: #{tpu_custom_call.1} parent=5 // pred_check_branch
        %1608 = sbr.rel (%p1606) target = $region112
      $region111: #{tpu_custom_call.1} parent=5 // pred_region
        %s1609 = ssub.s32 %s30, 2
        // Predicated region
        $region113: #{tpu_custom_call.1} parent=111 // pred_check
          %p1610 = pneg %p421
        $region114: #{tpu_custom_call.1} parent=111 // pred_check_branch
          %1612 = sbr.rel (%p1610) target = $region116
        $region115: #{tpu_custom_call.1} parent=111 // pred_region
          %s1613 = sand.u32 %s406, 1
          %s1614 = scalar_lea.sflag [#allocation7], %s1613
          %s1615 = sand.u32 %s406, 1
          %s1616 = smul.addr %s1615, 8
          %s1617 = scalar_lea.vmem [#allocation13], %s1616
          %1618 = dma.done %s1614, 128
        $region116: #{tpu_custom_call.1} parent=111 // pred_fallthru
          _
      $region112: #{tpu_custom_call.1} parent=5 // pred_fallthru
        _
    $region6: #{tpu_custom_call.1} parent=1 // loop_footer
      %s34 = sadd.s32 1, %s30
    $region7: #{tpu_custom_call.1} parent=1 // loop_footer_branch
      %29 = sbr.rel target = $region3
    $region8: #{tpu_custom_call.1} parent=1 // loop_exit
      _
    %1619 = vsyncpa [#allocation6], 1
    %s1620 = scalar_lea.sflag [#allocation6], 1
    %1621 = vsyncpa %s1620, 1
    %1622 = vsyncpa [#allocation9], 1
    %1623 = vsyncpa [#allocation12], 1
    %1624 = vsyncpa [#allocation7], 1
    %s1625 = scalar_lea.sflag [#allocation7], 1
    %1626 = vsyncpa %s1625, 1

</llo_original>
